<compile_context>
chip_gen: v7x
topology: tpu7x:2x2x1
jax: 0.10.0
libtpu: 0.0.40
codegen_flags: <defaults>
</compile_context>

<pallas_src>
import functools
import math

import jax
import jax.numpy as jnp
from jax.experimental import pallas as pl
from jax.experimental.pallas import tpu as pltpu

F32 = jnp.float32
BF16 = jnp.bfloat16
_VMEM_LIMIT = 32 * 1024 * 1024

VGG_CFG = (64, 64, "M", 128, 128, "M", 256, 256, 256, "M", 512, 512, 512, "M")


def _round_up(x, m):
    return (x + m - 1) // m * m


def _cparams(n_axes):
    return pltpu.CompilerParams(
        dimension_semantics=("parallel",) * n_axes,
        vmem_limit_bytes=_VMEM_LIMIT)


# ----------------------------------------------------------------------------
# Kernel 1: matmul (1x1 convs / downsample / head conv) with fused bias + act.
# K and N stay whole so the bf16 weight panel is VMEM-resident; only M is tiled.
# ----------------------------------------------------------------------------
def _mm_kernel(a_ref, w_ref, b_ref, o_ref, *, act):
    r = jnp.dot(a_ref[...], w_ref[...], preferred_element_type=F32) + b_ref[...]
    if act == "relu":
        r = jnp.maximum(r, 0.0)
    elif act == "sigmoid":
        r = jax.nn.sigmoid(r)
    o_ref[...] = r.astype(o_ref.dtype)


def matmul(a, w, bias=None, act=None, out_dtype=BF16):
    M, K = a.shape
    K2, N = w.shape
    assert K == K2
    a = a.astype(BF16)
    w = w.astype(BF16)
    b = (jnp.zeros((1, N), F32) if bias is None
         else bias.reshape(1, N).astype(F32))
    # M tile capped at ~2 MiB of A-block, multiple of 8, minimal padding.
    cap = max(8, (2 * 1024 * 1024) // (K * 2) // 8 * 8)
    nblk = -(-M // cap)
    tm = _round_up(-(-M // nblk), 8)
    Mp = tm * nblk
    if Mp != M:
        a = jnp.pad(a, ((0, Mp - M), (0, 0)))
    out = pl.pallas_call(
        functools.partial(_mm_kernel, act=act),
        out_shape=jax.ShapeDtypeStruct((Mp, N), out_dtype),
        grid_spec=pltpu.PrefetchScalarGridSpec(
            num_scalar_prefetch=0,
            grid=(nblk,),
            in_specs=[
                pl.BlockSpec((tm, K), lambda i: (i, 0)),
                pl.BlockSpec((K, N), lambda i: (0, 0)),
                pl.BlockSpec((1, N), lambda i: (0, 0)),
            ],
            out_specs=pl.BlockSpec((tm, N), lambda i: (i, 0))),
        compiler_params=_cparams(1),
    )(a, w, b)
    return out[:M] if Mp != M else out


# ----------------------------------------------------------------------------
# Kernel 2: direct stride-1 kxk conv.  Grid (batch, output row); each step does
# kh*kw small matmuls over the padded rows it reads.  No im2col, weights
# resident in VMEM (bf16), eval-BN folded, activation fused.
# ----------------------------------------------------------------------------
def _direct_conv_kernel(*refs, kh, kw, wo, act):
    x_refs = refs[:kh]
    w_ref, b_ref, o_ref = refs[kh], refs[kh + 1], refs[kh + 2]
    cout = o_ref.shape[-1]
    acc = jnp.zeros((wo, cout), F32)
    for i in range(kh):
        for j in range(kw):
            a = x_refs[i][0, 0, j:j + wo, :]                  # (wo, Cin)
            acc = acc + jnp.dot(a, w_ref[i, j],
                                preferred_element_type=F32)
    r = acc + b_ref[...]
    if act == "relu":
        r = jnp.maximum(r, 0.0)
    elif act == "sigmoid":
        r = jax.nn.sigmoid(r)
    o_ref[0, 0] = r.astype(o_ref.dtype)


def conv2d(x, w, bias=None, *, pad, act=None, bn=None, out_dtype=BF16):
    B, H, W, Cin = x.shape
    kh, kw, _, Cout = w.shape
    w = w.astype(F32)
    b = jnp.zeros((Cout,), F32) if bias is None else bias.astype(F32)
    if bn is not None:                       # fold eval-mode BN into w / b
        scale = bn["gamma"] / jnp.sqrt(bn["var"] + 1e-5)
        w = w * scale[None, None, None, :]
        b = (b - bn["mean"]) * scale + bn["beta"]
    Ho = H + 2 * pad - kh + 1
    Wo = W + 2 * pad - kw + 1
    xp = x.astype(BF16)
    if pad:
        xp = jnp.pad(xp, ((0, 0), (pad, pad), (pad, pad), (0, 0)))
    Hp, Wp = H + 2 * pad, W + 2 * pad
    row_specs = [
        pl.BlockSpec((1, 1, Wp, Cin), lambda bb, hh, i=i: (bb, hh + i, 0, 0))
        for i in range(kh)
    ]
    out = pl.pallas_call(
        functools.partial(_direct_conv_kernel, kh=kh, kw=kw, wo=Wo, act=act),
        out_shape=jax.ShapeDtypeStruct((B, Ho, Wo, Cout), out_dtype),
        grid_spec=pltpu.PrefetchScalarGridSpec(
            num_scalar_prefetch=0,
            grid=(B, Ho),
            in_specs=row_specs + [
                pl.BlockSpec((kh, kw, Cin, Cout), lambda bb, hh: (0, 0, 0, 0)),
                pl.BlockSpec((1, Cout), lambda bb, hh: (0, 0)),
            ],
            out_specs=pl.BlockSpec((1, 1, Wo, Cout),
                                   lambda bb, hh: (bb, hh, 0, 0))),
        compiler_params=_cparams(2),
    )(*([xp] * kh), w.astype(BF16), b.reshape(1, Cout))
    return out


# ----------------------------------------------------------------------------
# Kernel 3: pair-max (2x2 stride-2 pooling as two passes over free reshapes).
# ----------------------------------------------------------------------------
def _pairmax_kernel(x_ref, o_ref):
    h = o_ref.shape[-1]
    o_ref[...] = jnp.maximum(x_ref[:, :h], x_ref[:, h:])


def _pairmax(x, half):
    R, width = x.shape                                   # width == 2 * half
    cap = max(8, (2 * 1024 * 1024) // (width * 2) // 8 * 8)
    nblk = -(-R // cap)
    tm = _round_up(-(-R // nblk), 8)
    Rp = tm * nblk
    if Rp != R:
        x = jnp.pad(x, ((0, Rp - R), (0, 0)))
    out = pl.pallas_call(
        _pairmax_kernel,
        out_shape=jax.ShapeDtypeStruct((Rp, half), x.dtype),
        grid_spec=pltpu.PrefetchScalarGridSpec(
            num_scalar_prefetch=0,
            grid=(nblk,),
            in_specs=[pl.BlockSpec((tm, width), lambda i: (i, 0))],
            out_specs=pl.BlockSpec((tm, half), lambda i: (i, 0))),
        compiler_params=_cparams(1),
    )(x)
    return out[:R] if Rp != R else out


def maxpool2x2(x):
    B, H, W, C = x.shape
    y = _pairmax(x.reshape(B * (H // 2), 2 * W * C), W * C)   # max over row pair
    y = _pairmax(y.reshape(B * (H // 2) * (W // 2), 2 * C), C)  # max over col pair
    return y.reshape(B, H // 2, W // 2, C)


# ----------------------------------------------------------------------------
# Kernel 4: 3x3 stride-1 pad-1 max-pool, 9-tap max done in-kernel per batch.
# ----------------------------------------------------------------------------
def _pool3_kernel(x_ref, o_ref):
    ho, wo = o_ref.shape[1], o_ref.shape[2]
    r = x_ref[0, 0:ho, 0:wo, :]
    for i in range(3):
        for j in range(3):
            if i == 0 and j == 0:
                continue
            r = jnp.maximum(r, x_ref[0, i:i + ho, j:j + wo, :])
    o_ref[0] = r


def maxpool3x3_s1(x):
    B, H, W, C = x.shape
    xp = jnp.pad(x, ((0, 0), (1, 1), (1, 1), (0, 0)),
                 constant_values=-jnp.inf)
    return pl.pallas_call(
        _pool3_kernel,
        out_shape=jax.ShapeDtypeStruct((B, H, W, C), x.dtype),
        grid_spec=pltpu.PrefetchScalarGridSpec(
            num_scalar_prefetch=0,
            grid=(B,),
            in_specs=[pl.BlockSpec((1, H + 2, W + 2, C),
                                   lambda b: (b, 0, 0, 0))],
            out_specs=pl.BlockSpec((1, H, W, C), lambda b: (b, 0, 0, 0))),
        compiler_params=_cparams(1),
    )(xp)


# ----------------------------------------------------------------------------
# Kernel 5: global spatial mean & max pooling (optionally of relu(x)).
# ----------------------------------------------------------------------------
def _spool_kernel(x_ref, mean_ref, max_ref, *, relu):
    x = x_ref[0].astype(F32)                              # (HW, C)
    if relu:
        x = jnp.maximum(x, 0.0)
    mean_ref[0] = jnp.mean(x, axis=0, keepdims=True)
    max_ref[0] = jnp.max(x, axis=0, keepdims=True)


def spatial_pool(x, relu=False):
    B, HW, C = x.shape
    mean, mx = pl.pallas_call(
        functools.partial(_spool_kernel, relu=relu),
        out_shape=(jax.ShapeDtypeStruct((B, 1, C), F32),
                   jax.ShapeDtypeStruct((B, 1, C), F32)),
        grid_spec=pltpu.PrefetchScalarGridSpec(
            num_scalar_prefetch=0,
            grid=(B,),
            in_specs=[pl.BlockSpec((1, HW, C), lambda b: (b, 0, 0))],
            out_specs=[pl.BlockSpec((1, 1, C), lambda b: (b, 0, 0)),
                       pl.BlockSpec((1, 1, C), lambda b: (b, 0, 0))]),
        compiler_params=_cparams(1),
    )(x)
    return mean.reshape(B, C), mx.reshape(B, C)


# ----------------------------------------------------------------------------
# Kernel 6: batched gram matrices  cha = x^T x (C,C),  spa = x x^T (HW,HW).
# ----------------------------------------------------------------------------
def _gram_kernel(x_ref, cha_ref, spa_ref):
    x = x_ref[0].astype(F32)                              # (HW, C)
    xt = jnp.transpose(x)                                 # (C, HW)
    spa_ref[0] = jnp.dot(x, xt, preferred_element_type=F32)
    cha_ref[0] = jnp.dot(xt, x, preferred_element_type=F32)


def gram_matrices(x):
    B, HW, C = x.shape
    return pl.pallas_call(
        _gram_kernel,
        out_shape=(jax.ShapeDtypeStruct((B, C, C), F32),
                   jax.ShapeDtypeStruct((B, HW, HW), F32)),
        grid_spec=pltpu.PrefetchScalarGridSpec(
            num_scalar_prefetch=0,
            grid=(B,),
            in_specs=[pl.BlockSpec((1, HW, C), lambda b: (b, 0, 0))],
            out_specs=[pl.BlockSpec((1, C, C), lambda b: (b, 0, 0)),
                       pl.BlockSpec((1, HW, HW), lambda b: (b, 0, 0))]),
        compiler_params=_cparams(1),
    )(x)


# ----------------------------------------------------------------------------
# Kernel 7: CBAM channel-gate scaling + per-pixel [mean, max] maps (one pass).
# ----------------------------------------------------------------------------
def _cbam_cscale_kernel(x_ref, att_ref, xc_ref, st_ref):
    x = x_ref[0].astype(F32)                              # (HW, C)
    a = att_ref[0].astype(F32)                            # (1, C) -> broadcast
    xc = x * a
    xc_ref[0] = xc.astype(xc_ref.dtype)
    st_ref[0, :, 0:1] = jnp.mean(xc, axis=1, keepdims=True).astype(st_ref.dtype)
    st_ref[0, :, 1:2] = jnp.max(xc, axis=1, keepdims=True).astype(st_ref.dtype)


def cbam_channel_scale(x, att):
    B, HW, C = x.shape
    att = att.reshape(B, 1, C).astype(F32)
    return pl.pallas_call(
        _cbam_cscale_kernel,
        out_shape=(jax.ShapeDtypeStruct((B, HW, C), x.dtype),
                   jax.ShapeDtypeStruct((B, HW, 2), x.dtype)),
        grid_spec=pltpu.PrefetchScalarGridSpec(
            num_scalar_prefetch=0,
            grid=(B,),
            in_specs=[pl.BlockSpec((1, HW, C), lambda b: (b, 0, 0)),
                      pl.BlockSpec((1, 1, C), lambda b: (b, 0, 0))],
            out_specs=[pl.BlockSpec((1, HW, C), lambda b: (b, 0, 0)),
                       pl.BlockSpec((1, HW, 2), lambda b: (b, 0, 0))]),
        compiler_params=_cparams(1),
    )(x, att)


# ----------------------------------------------------------------------------
# Kernel 8: CBAM spatial-gate scaling + residual add + ReLU (one pass).
# ----------------------------------------------------------------------------
def _cbam_sscale_kernel(xc_ref, att_ref, res_ref, o_ref):
    xc = xc_ref[0].astype(F32)                            # (HW, C)
    a = att_ref[0].astype(F32)                            # (HW, 1) -> broadcast
    r = res_ref[0].astype(F32)
    o_ref[0] = jnp.maximum(xc * a + r, 0.0).astype(o_ref.dtype)


def cbam_spatial_residual(xc, att_s, res):
    B, HW, C = xc.shape
    return pl.pallas_call(
        _cbam_sscale_kernel,
        out_shape=jax.ShapeDtypeStruct((B, HW, C), xc.dtype),
        grid_spec=pltpu.PrefetchScalarGridSpec(
            num_scalar_prefetch=0,
            grid=(B,),
            in_specs=[pl.BlockSpec((1, HW, C), lambda b: (b, 0, 0)),
                      pl.BlockSpec((1, HW, 1), lambda b: (b, 0, 0)),
                      pl.BlockSpec((1, HW, C), lambda b: (b, 0, 0))],
            out_specs=pl.BlockSpec((1, HW, C), lambda b: (b, 0, 0))),
        compiler_params=_cparams(1),
    )(xc, att_s, res)


# ----------------------------------------------------------------------------
# Model glue.
# ----------------------------------------------------------------------------
def l2_normalize(v, eps=1e-12):
    n = jnp.sqrt(jnp.sum(v * v, axis=1, keepdims=True))
    return v / jnp.maximum(n, eps)


def basic_block(x, bp):
    B, H, W, Cin = x.shape
    HW = H * W
    Cout = bp["w1"].shape[-1]
    # downsample branch: 1x1 conv (bias=False) with folded eval-BN
    dscale = bp["down_bn"]["gamma"] / jnp.sqrt(bp["down_bn"]["var"] + 1e-5)
    dw = bp["down_w"] * dscale[None, :]
    db = bp["down_bn"]["beta"] - bp["down_bn"]["mean"] * dscale
    residual = matmul(x.reshape(B * HW, Cin), dw, db).reshape(B, HW, Cout)
    # main branch: conv+BN+ReLU, conv+BN (BN folded, act fused)
    out = conv2d(x, bp["w1"], None, pad=1, act="relu", bn=bp["bn1"])
    out = conv2d(out, bp["w2"], None, pad=1, act=None, bn=bp["bn2"])
    out3 = out.reshape(B, HW, Cout)
    # CBAM channel gate: shared MLP on tiny (B, C) vectors -> plain XLA
    avg_v, max_v = spatial_pool(out3)
    cp = bp["cbam"]

    def mlp(v):
        return jnp.maximum(v @ cp["w1"] + cp["b1"], 0.0) @ cp["w2"] + cp["b2"]

    att_c = jax.nn.sigmoid(mlp(avg_v) + mlp(max_v))              # (B, Cout)
    xc, stats = cbam_channel_scale(out3, att_c)
    # CBAM spatial gate: 7x7 conv on [mean, max] maps, sigmoid fused in epilogue
    att_s = conv2d(stats.reshape(B, H, W, 2), cp["sp_w"], cp["sp_b"],
                   pad=3, act="sigmoid")                         # (B,H,W,1)
    out = cbam_spatial_residual(xc, att_s.reshape(B, HW, 1), residual)
    return out.reshape(B, H, W, Cout)


def vgg_inception_net(x_nchw, p):
    x = jnp.transpose(x_nchw, (0, 2, 3, 1)).astype(BF16)          # NCHW -> NHWC

    # frozen VGG16 features[0:24] (layers 24..30 replaced by identity)
    convs = iter(p["vgg"])
    for v in VGG_CFG:
        if v == "M":
            x = maxpool2x2(x)
        else:
            w, b = next(convs)
            x = conv2d(x, w, b, pad=1, act="relu")
    B, H, W, C = x.shape
    HW = H * W

    # VGGInceptionModule
    c1 = matmul(x.reshape(B * HW, C), p["inc_c1"][0], p["inc_c1"][1],
                act="relu").reshape(B, H, W, -1)
    c3 = conv2d(x, p["inc_c3"][0], p["inc_c3"][1], pad=1, act="relu")
    c5 = conv2d(x, p["inc_c5"][0], p["inc_c5"][1], pad=2, act="relu")
    pooled = maxpool3x3_s1(x)
    r = basic_block(x, p["bb2"])
    r = basic_block(r, p["bb3"])
    feats = jnp.concatenate([c1, c3, c5, pooled, r], axis=-1)     # (B,H,W,992)

    xh = matmul(feats.reshape(B * HW, feats.shape[-1]),
                p["conv2d"][0], p["conv2d"][1]).reshape(B, HW, 512)

    # gram matrices + eigenvalues
    cha, spa = gram_matrices(xh)
    cha_value = jnp.linalg.eigvalsh(cha)                          # (B, 512)
    spa_value = jnp.linalg.eigvalsh(spa)                          # (B, HW)
    # dropout(0.3) -> identity in eval mode
    cha_value = l2_normalize(cha_value @ p["fn2"][0] + p["fn2"][1])
    spa_value = l2_normalize(spa_value @ p["fn1"][0] + p["fn1"][1])

    # head: relu -> eval-BN -> global avg pool -> fn.  mean(relu(x)) is one
    # Pallas pass; the per-channel BN affine commutes with the mean and is
    # applied on the tiny (B, C) vector.
    mean, _ = spatial_pool(xh, relu=True)
    scale = p["bn"]["gamma"] / jnp.sqrt(p["bn"]["var"] + 1e-5)
    shift = p["bn"]["beta"] - p["bn"]["mean"] * scale
    pooled_feat = mean * scale[None, :] + shift[None, :]
    logits = pooled_feat @ p["fn"][0] + p["fn"][1]                # (B, 44)

    return jnp.concatenate([logits, cha_value, spa_value], axis=1)  # (B, 60)


# ----------------------------------------------------------------------------
# Deterministic parameters (He-style init).
# ----------------------------------------------------------------------------
def build_params(key, hw):
    state = {"key": key}

    def nkey():
        state["key"], sub = jax.random.split(state["key"])
        return sub

    def conv_w(kh, kw, cin, cout):
        return (jax.random.normal(nkey(), (kh, kw, cin, cout), F32)
                * math.sqrt(2.0 / (kh * kw * cin)))

    def lin_w(cin, cout):
        return (jax.random.normal(nkey(), (cin, cout), F32)
                * math.sqrt(1.0 / cin))

    def bias(c):
        return jax.random.normal(nkey(), (c,), F32) * 0.01

    def bn(c):
        return dict(gamma=jnp.ones((c,), F32), beta=jnp.zeros((c,), F32),
                    mean=jnp.zeros((c,), F32), var=jnp.ones((c,), F32))

    def cbam_p(c, r=4):
        h = c // r
        return dict(w1=lin_w(c, h), b1=bias(h), w2=lin_w(h, c), b2=bias(c),
                    sp_w=conv_w(7, 7, 2, 1), sp_b=bias(1))

    def block_p(cin, cout):
        return dict(w1=conv_w(3, 3, cin, cout), bn1=bn(cout),
                    w2=conv_w(3, 3, cout, cout), bn2=bn(cout),
                    down_w=lin_w(cin, cout), down_bn=bn(cout),
                    cbam=cbam_p(cout))

    vgg, cin = [], 3
    for v in VGG_CFG:
        if v == "M":
            continue
        vgg.append((conv_w(3, 3, cin, v), bias(v)))
        cin = v

    return dict(
        vgg=vgg,
        inc_c1=(lin_w(512, 64), bias(64)),
        inc_c3=(conv_w(3, 3, 512, 128), bias(128)),
        inc_c5=(conv_w(5, 5, 512, 32), bias(32)),
        bb2=block_p(512, 128),
        bb3=block_p(128, 256),
        conv2d=(lin_w(992, 512), bias(512)),
        bn=bn(512),
        fn=(lin_w(512, 44), bias(44)),
        fn1=(lin_w(hw, 8), bias(8)),
        fn2=(lin_w(512, 8), bias(8)),
    )


if __name__ == "__main__":
    key = jax.random.PRNGKey(0)
    pkey, xkey = jax.random.split(key)
    # Small test shape: 32x32 input -> VGG16 features give a 2x2x512 map, so the
    # spatial-gram head uses HW = 4 (fn1 becomes Linear(4, 8); the torch module
    # hard-codes Linear(196, 8) because it assumes 224x224 inputs).
    B, S = 2, 32
    hw = (S // 16) ** 2
    params = build_params(pkey, hw)
    x = jax.random.normal(xkey, (B, 3, S, S), F32)
    out = jax.block_until_ready(vgg_inception_net(x, params))
    assert out.shape == (B, 60), out.shape
    assert bool(jnp.all(jnp.isfinite(out)))
    print("KERNEL_OK")
</pallas_src>

<mosaic_0001>
module attributes {stable_mosaic.version = 11 : i64} {
  func.func @_direct_conv_kernel(%arg0: i32, %arg1: i32, %arg2: memref<1x1x34x3xbf16, #tpu.memory_space<vmem>>, %arg3: memref<1x1x34x3xbf16, #tpu.memory_space<vmem>>, %arg4: memref<1x1x34x3xbf16, #tpu.memory_space<vmem>>, %arg5: memref<3x3x3x64xbf16, #tpu.memory_space<vmem>>, %arg6: memref<1x64xf32, #tpu.memory_space<vmem>>, %arg7: memref<1x1x32x64xbf16, #tpu.memory_space<vmem>>) attributes {dimension_semantics = [#tpu.dimension_semantics<parallel>, #tpu.dimension_semantics<parallel>], iteration_bounds = array<i64: 2, 32>, scalar_prefetch = 0 : i64, scratch_operands = 0 : i64, tpu.core_type = #tpu.core_type<tc>, window_params = [{transform_indices = @transform_0, window_bounds = array<i64: 1, 1, 34, 3>}, {transform_indices = @transform_1, window_bounds = array<i64: 1, 1, 34, 3>}, {transform_indices = @transform_2, window_bounds = array<i64: 1, 1, 34, 3>}, {pipeline_mode = #tpu.pipeline_mode<synchronous>, transform_indices = @transform_3, window_bounds = array<i64: 3, 3, 3, 64>}, {pipeline_mode = #tpu.pipeline_mode<synchronous>, transform_indices = @transform_4, window_bounds = array<i64: 1, 64>}, {transform_indices = @transform_5, window_bounds = array<i64: 1, 1, 32, 64>}]} {
    %cst = arith.constant 0.000000e+00 : f32
    %0 = vector.broadcast %cst : f32 to vector<32x64xf32>
    %c0 = arith.constant 0 : index
    %c0_0 = arith.constant 0 : index
    %c0_1 = arith.constant 0 : index
    %c0_2 = arith.constant 0 : index
    %1 = vector.load %arg2[%c0, %c0_0, %c0_1, %c0_2] : memref<1x1x34x3xbf16, #tpu.memory_space<vmem>>, vector<1x1x32x3xbf16>
    %2 = vector.shape_cast %1 : vector<1x1x32x3xbf16> to vector<32x3xbf16>
    %c0_3 = arith.constant 0 : index
    %c0_4 = arith.constant 0 : index
    %c0_5 = arith.constant 0 : index
    %c0_6 = arith.constant 0 : index
    %3 = vector.load %arg5[%c0_3, %c0_4, %c0_5, %c0_6] : memref<3x3x3x64xbf16, #tpu.memory_space<vmem>>, vector<1x1x3x64xbf16>
    %4 = vector.shape_cast %3 : vector<1x1x3x64xbf16> to vector<3x64xbf16>
    %cst_7 = arith.constant dense<0.000000e+00> : vector<32x64xf32>
    %5 = tpu.matmul %2, %4, %cst_7 {dimension_numbers = #tpu.dot_dimension_numbers<[1], [0], [0], [1], [0, 0, 1, 1], [], []>} : vector<32x3xbf16>, vector<3x64xbf16>, vector<32x64xf32> -> vector<32x64xf32>
    %6 = arith.addf %0, %5 : vector<32x64xf32>
    %c0_8 = arith.constant 0 : index
    %c0_9 = arith.constant 0 : index
    %c1 = arith.constant 1 : index
    %c0_10 = arith.constant 0 : index
    %7 = vector.load %arg2[%c0_8, %c0_9, %c1, %c0_10] : memref<1x1x34x3xbf16, #tpu.memory_space<vmem>>, vector<1x1x32x3xbf16>
    %8 = vector.shape_cast %7 : vector<1x1x32x3xbf16> to vector<32x3xbf16>
    %c0_11 = arith.constant 0 : index
    %c1_12 = arith.constant 1 : index
    %c0_13 = arith.constant 0 : index
    %c0_14 = arith.constant 0 : index
    %9 = vector.load %arg5[%c0_11, %c1_12, %c0_13, %c0_14] : memref<3x3x3x64xbf16, #tpu.memory_space<vmem>>, vector<1x1x3x64xbf16>
    %10 = vector.shape_cast %9 : vector<1x1x3x64xbf16> to vector<3x64xbf16>
    %cst_15 = arith.constant dense<0.000000e+00> : vector<32x64xf32>
    %11 = tpu.matmul %8, %10, %cst_15 {dimension_numbers = #tpu.dot_dimension_numbers<[1], [0], [0], [1], [0, 0, 1, 1], [], []>} : vector<32x3xbf16>, vector<3x64xbf16>, vector<32x64xf32> -> vector<32x64xf32>
    %12 = arith.addf %6, %11 : vector<32x64xf32>
    %c0_16 = arith.constant 0 : index
    %c0_17 = arith.constant 0 : index
    %c2 = arith.constant 2 : index
    %c0_18 = arith.constant 0 : index
    %13 = vector.load %arg2[%c0_16, %c0_17, %c2, %c0_18] : memref<1x1x34x3xbf16, #tpu.memory_space<vmem>>, vector<1x1x32x3xbf16>
    %14 = vector.shape_cast %13 : vector<1x1x32x3xbf16> to vector<32x3xbf16>
    %c0_19 = arith.constant 0 : index
    %c2_20 = arith.constant 2 : index
    %c0_21 = arith.constant 0 : index
    %c0_22 = arith.constant 0 : index
    %15 = vector.load %arg5[%c0_19, %c2_20, %c0_21, %c0_22] : memref<3x3x3x64xbf16, #tpu.memory_space<vmem>>, vector<1x1x3x64xbf16>
    %16 = vector.shape_cast %15 : vector<1x1x3x64xbf16> to vector<3x64xbf16>
    %cst_23 = arith.constant dense<0.000000e+00> : vector<32x64xf32>
    %17 = tpu.matmul %14, %16, %cst_23 {dimension_numbers = #tpu.dot_dimension_numbers<[1], [0], [0], [1], [0, 0, 1, 1], [], []>} : vector<32x3xbf16>, vector<3x64xbf16>, vector<32x64xf32> -> vector<32x64xf32>
    %18 = arith.addf %12, %17 : vector<32x64xf32>
    %c0_24 = arith.constant 0 : index
    %c0_25 = arith.constant 0 : index
    %c0_26 = arith.constant 0 : index
    %c0_27 = arith.constant 0 : index
    %19 = vector.load %arg3[%c0_24, %c0_25, %c0_26, %c0_27] : memref<1x1x34x3xbf16, #tpu.memory_space<vmem>>, vector<1x1x32x3xbf16>
    %20 = vector.shape_cast %19 : vector<1x1x32x3xbf16> to vector<32x3xbf16>
    %c1_28 = arith.constant 1 : index
    %c0_29 = arith.constant 0 : index
    %c0_30 = arith.constant 0 : index
    %c0_31 = arith.constant 0 : index
    %21 = vector.load %arg5[%c1_28, %c0_29, %c0_30, %c0_31] : memref<3x3x3x64xbf16, #tpu.memory_space<vmem>>, vector<1x1x3x64xbf16>
    %22 = vector.shape_cast %21 : vector<1x1x3x64xbf16> to vector<3x64xbf16>
    %cst_32 = arith.constant dense<0.000000e+00> : vector<32x64xf32>
    %23 = tpu.matmul %20, %22, %cst_32 {dimension_numbers = #tpu.dot_dimension_numbers<[1], [0], [0], [1], [0, 0, 1, 1], [], []>} : vector<32x3xbf16>, vector<3x64xbf16>, vector<32x64xf32> -> vector<32x64xf32>
    %24 = arith.addf %18, %23 : vector<32x64xf32>
    %c0_33 = arith.constant 0 : index
    %c0_34 = arith.constant 0 : index
    %c1_35 = arith.constant 1 : index
    %c0_36 = arith.constant 0 : index
    %25 = vector.load %arg3[%c0_33, %c0_34, %c1_35, %c0_36] : memref<1x1x34x3xbf16, #tpu.memory_space<vmem>>, vector<1x1x32x3xbf16>
    %26 = vector.shape_cast %25 : vector<1x1x32x3xbf16> to vector<32x3xbf16>
    %c1_37 = arith.constant 1 : index
    %c1_38 = arith.constant 1 : index
    %c0_39 = arith.constant 0 : index
    %c0_40 = arith.constant 0 : index
    %27 = vector.load %arg5[%c1_37, %c1_38, %c0_39, %c0_40] : memref<3x3x3x64xbf16, #tpu.memory_space<vmem>>, vector<1x1x3x64xbf16>
    %28 = vector.shape_cast %27 : vector<1x1x3x64xbf16> to vector<3x64xbf16>
    %cst_41 = arith.constant dense<0.000000e+00> : vector<32x64xf32>
    %29 = tpu.matmul %26, %28, %cst_41 {dimension_numbers = #tpu.dot_dimension_numbers<[1], [0], [0], [1], [0, 0, 1, 1], [], []>} : vector<32x3xbf16>, vector<3x64xbf16>, vector<32x64xf32> -> vector<32x64xf32>
    %30 = arith.addf %24, %29 : vector<32x64xf32>
    %c0_42 = arith.constant 0 : index
    %c0_43 = arith.constant 0 : index
    %c2_44 = arith.constant 2 : index
    %c0_45 = arith.constant 0 : index
    %31 = vector.load %arg3[%c0_42, %c0_43, %c2_44, %c0_45] : memref<1x1x34x3xbf16, #tpu.memory_space<vmem>>, vector<1x1x32x3xbf16>
    %32 = vector.shape_cast %31 : vector<1x1x32x3xbf16> to vector<32x3xbf16>
    %c1_46 = arith.constant 1 : index
    %c2_47 = arith.constant 2 : index
    %c0_48 = arith.constant 0 : index
    %c0_49 = arith.constant 0 : index
    %33 = vector.load %arg5[%c1_46, %c2_47, %c0_48, %c0_49] : memref<3x3x3x64xbf16, #tpu.memory_space<vmem>>, vector<1x1x3x64xbf16>
    %34 = vector.shape_cast %33 : vector<1x1x3x64xbf16> to vector<3x64xbf16>
    %cst_50 = arith.constant dense<0.000000e+00> : vector<32x64xf32>
    %35 = tpu.matmul %32, %34, %cst_50 {dimension_numbers = #tpu.dot_dimension_numbers<[1], [0], [0], [1], [0, 0, 1, 1], [], []>} : vector<32x3xbf16>, vector<3x64xbf16>, vector<32x64xf32> -> vector<32x64xf32>
    %36 = arith.addf %30, %35 : vector<32x64xf32>
    %c0_51 = arith.constant 0 : index
    %c0_52 = arith.constant 0 : index
    %c0_53 = arith.constant 0 : index
    %c0_54 = arith.constant 0 : index
    %37 = vector.load %arg4[%c0_51, %c0_52, %c0_53, %c0_54] : memref<1x1x34x3xbf16, #tpu.memory_space<vmem>>, vector<1x1x32x3xbf16>
    %38 = vector.shape_cast %37 : vector<1x1x32x3xbf16> to vector<32x3xbf16>
    %c2_55 = arith.constant 2 : index
    %c0_56 = arith.constant 0 : index
    %c0_57 = arith.constant 0 : index
    %c0_58 = arith.constant 0 : index
    %39 = vector.load %arg5[%c2_55, %c0_56, %c0_57, %c0_58] : memref<3x3x3x64xbf16, #tpu.memory_space<vmem>>, vector<1x1x3x64xbf16>
    %40 = vector.shape_cast %39 : vector<1x1x3x64xbf16> to vector<3x64xbf16>
    %cst_59 = arith.constant dense<0.000000e+00> : vector<32x64xf32>
    %41 = tpu.matmul %38, %40, %cst_59 {dimension_numbers = #tpu.dot_dimension_numbers<[1], [0], [0], [1], [0, 0, 1, 1], [], []>} : vector<32x3xbf16>, vector<3x64xbf16>, vector<32x64xf32> -> vector<32x64xf32>
    %42 = arith.addf %36, %41 : vector<32x64xf32>
    %c0_60 = arith.constant 0 : index
    %c0_61 = arith.constant 0 : index
    %c1_62 = arith.constant 1 : index
    %c0_63 = arith.constant 0 : index
    %43 = vector.load %arg4[%c0_60, %c0_61, %c1_62, %c0_63] : memref<1x1x34x3xbf16, #tpu.memory_space<vmem>>, vector<1x1x32x3xbf16>
    %44 = vector.shape_cast %43 : vector<1x1x32x3xbf16> to vector<32x3xbf16>
    %c2_64 = arith.constant 2 : index
    %c1_65 = arith.constant 1 : index
    %c0_66 = arith.constant 0 : index
    %c0_67 = arith.constant 0 : index
    %45 = vector.load %arg5[%c2_64, %c1_65, %c0_66, %c0_67] : memref<3x3x3x64xbf16, #tpu.memory_space<vmem>>, vector<1x1x3x64xbf16>
    %46 = vector.shape_cast %45 : vector<1x1x3x64xbf16> to vector<3x64xbf16>
    %cst_68 = arith.constant dense<0.000000e+00> : vector<32x64xf32>
    %47 = tpu.matmul %44, %46, %cst_68 {dimension_numbers = #tpu.dot_dimension_numbers<[1], [0], [0], [1], [0, 0, 1, 1], [], []>} : vector<32x3xbf16>, vector<3x64xbf16>, vector<32x64xf32> -> vector<32x64xf32>
    %48 = arith.addf %42, %47 : vector<32x64xf32>
    %c0_69 = arith.constant 0 : index
    %c0_70 = arith.constant 0 : index
    %c2_71 = arith.constant 2 : index
    %c0_72 = arith.constant 0 : index
    %49 = vector.load %arg4[%c0_69, %c0_70, %c2_71, %c0_72] : memref<1x1x34x3xbf16, #tpu.memory_space<vmem>>, vector<1x1x32x3xbf16>
    %50 = vector.shape_cast %49 : vector<1x1x32x3xbf16> to vector<32x3xbf16>
    %c2_73 = arith.constant 2 : index
    %c2_74 = arith.constant 2 : index
    %c0_75 = arith.constant 0 : index
    %c0_76 = arith.constant 0 : index
    %51 = vector.load %arg5[%c2_73, %c2_74, %c0_75, %c0_76] : memref<3x3x3x64xbf16, #tpu.memory_space<vmem>>, vector<1x1x3x64xbf16>
    %52 = vector.shape_cast %51 : vector<1x1x3x64xbf16> to vector<3x64xbf16>
    %cst_77 = arith.constant dense<0.000000e+00> : vector<32x64xf32>
    %53 = tpu.matmul %50, %52, %cst_77 {dimension_numbers = #tpu.dot_dimension_numbers<[1], [0], [0], [1], [0, 0, 1, 1], [], []>} : vector<32x3xbf16>, vector<3x64xbf16>, vector<32x64xf32> -> vector<32x64xf32>
    %54 = arith.addf %48, %53 : vector<32x64xf32>
    %c0_78 = arith.constant 0 : index
    %c0_79 = arith.constant 0 : index
    %55 = vector.load %arg6[%c0_78, %c0_79] : memref<1x64xf32, #tpu.memory_space<vmem>>, vector<1x64xf32>
    %56 = vector.broadcast %55 : vector<1x64xf32> to vector<32x64xf32>
    %57 = arith.addf %54, %56 : vector<32x64xf32>
    %cst_80 = arith.constant 0.000000e+00 : f32
    %58 = vector.broadcast %cst_80 : f32 to vector<32x64xf32>
    %59 = arith.maximumf %57, %58 : vector<32x64xf32>
    %60 = arith.truncf %59 : vector<32x64xf32> to vector<32x64xbf16>
    %c0_81 = arith.constant 0 : index
    %c0_82 = arith.constant 0 : index
    %c0_83 = arith.constant 0 : index
    %c0_84 = arith.constant 0 : index
    %61 = vector.load %arg7[%c0_81, %c0_82, %c0_83, %c0_84] : memref<1x1x32x64xbf16, #tpu.memory_space<vmem>>, vector<1x1x32x64xbf16>
    %62 = vector.shape_cast %61 : vector<1x1x32x64xbf16> to vector<32x64xbf16>
    %63 = vector.shape_cast %60 : vector<32x64xbf16> to vector<1x1x32x64xbf16>
    tpu.vector_store %arg7[%c0_81, %c0_82, %c0_83, %c0_84], %63 {strides = array<i32>} : memref<1x1x32x64xbf16, #tpu.memory_space<vmem>>, vector<1x1x32x64xbf16>,
    return
  }
  func.func @transform_0(%arg0: i32, %arg1: i32) -> (i32, i32, i32, i32) {
    %c0_i32 = arith.constant 0 : i32
    %0 = arith.addi %arg1, %c0_i32 : i32
    %c0_i32_0 = arith.constant 0 : i32
    %c0_i32_1 = arith.constant 0 : i32
    %c0_i32_2 = arith.constant 0 : i32
    return %arg0, %0, %c0_i32_0, %c0_i32_1 : i32, i32, i32, i32
  }
  func.func @transform_1(%arg0: i32, %arg1: i32) -> (i32, i32, i32, i32) {
    %c1_i32 = arith.constant 1 : i32
    %0 = arith.addi %arg1, %c1_i32 : i32
    %c0_i32 = arith.constant 0 : i32
    %c0_i32_0 = arith.constant 0 : i32
    %c0_i32_1 = arith.constant 0 : i32
    return %arg0, %0, %c0_i32, %c0_i32_0 : i32, i32, i32, i32
  }
  func.func @transform_2(%arg0: i32, %arg1: i32) -> (i32, i32, i32, i32) {
    %c2_i32 = arith.constant 2 : i32
    %0 = arith.addi %arg1, %c2_i32 : i32
    %c0_i32 = arith.constant 0 : i32
    %c0_i32_0 = arith.constant 0 : i32
    %c0_i32_1 = arith.constant 0 : i32
    return %arg0, %0, %c0_i32, %c0_i32_0 : i32, i32, i32, i32
  }
  func.func @transform_3(%arg0: i32, %arg1: i32) -> (i32, i32, i32, i32) {
    %c0_i32 = arith.constant 0 : i32
    %c0_i32_0 = arith.constant 0 : i32
    %c0_i32_1 = arith.constant 0 : i32
    %c0_i32_2 = arith.constant 0 : i32
    %c0_i32_3 = arith.constant 0 : i32
    return %c0_i32, %c0_i32_0, %c0_i32_1, %c0_i32_2 : i32, i32, i32, i32
  }
  func.func @transform_4(%arg0: i32, %arg1: i32) -> (i32, i32) {
    %c0_i32 = arith.constant 0 : i32
    %c0_i32_0 = arith.constant 0 : i32
    %c0_i32_1 = arith.constant 0 : i32
    return %c0_i32, %c0_i32_0 : i32, i32
  }
  func.func @transform_5(%arg0: i32, %arg1: i32) -> (i32, i32, i32, i32) {
    %c0_i32 = arith.constant 0 : i32
    %c0_i32_0 = arith.constant 0 : i32
    %c0_i32_1 = arith.constant 0 : i32
    return %arg0, %arg1, %c0_i32, %c0_i32_0 : i32, i32, i32, i32
  }
}

</mosaic_0001>

<llo_original>
// kernel: tpu_custom_call.1
$region0: #{tpu_custom_call.1}
  #allocation0 [shape = 'u32[]', space=smem, size = 0x4, offset = 0x4, fixed_abs, tag = 'smem constant byte address 0x4 - core index']
  #allocation1 [shape = 'u32[144,128]{1,0:T(1,128)}', space=vmem, size = 0x12000, scoped, tag = 'internal scratch']
  %s0 = inlined_call_operand.vmem [shape: bf16[2,34,34,3], index: 0, kind: input, shape index: {}]
  %s1 = inlined_call_operand.vmem [shape: bf16[2,34,34,3], index: 1, kind: input, shape index: {}]
  %s2 = inlined_call_operand.vmem [shape: bf16[2,34,34,3], index: 2, kind: input, shape index: {}]
  %s3 = inlined_call_operand.vmem [shape: bf16[3,3,3,64], index: 3, kind: input, shape index: {}]
  %s4 = inlined_call_operand.vmem [shape: f32[1,64], index: 4, kind: input, shape index: {}]
  %s5 = inlined_call_operand.hbm [shape: bf16[2,32,32,64], index: 5, kind: output, shape index: {}]
  %s6 = sld [smem:[#allocation0]]
  $region53: #{tpu_custom_call.1} parent=0
    _
  %s8 = ssub.s32 1, %s6
  %s9 = scalar_select 0, %s8, %s6
  $region1: #{tpu_custom_call.1} parent=0
    #allocation2 [shape = 'u8[16384]{0}', space=vmem, size = 0x4000, scoped, tag = 'output window, operand 0']
    #allocation3 [shape = 's32[2]{0}', space=sflag, size = 0x8, scoped, tag = 'scoped memory for tpu_custom_call.1']
    %10 = vsyncpa [#allocation3], 0
    %s11 = scalar_lea.sflag [#allocation3], 1
    %12 = vsyncpa %s11, 0
    loop: start=0, step=1, limit=66
    $region2: #{tpu_custom_call.1} parent=1 // loop_pre_header
      _
    $region3: #{tpu_custom_call.1} parent=1 // loop_header
      %s14 = sphi 0, %s18
      %p15 = scmp.ge.s32.totalorder %s14, 66
      %s21 = sphi 0, %s33
      %s22 = sphi 0, %s29
      %s23 = sphi 0, %s21
      %s24 = sphi 0, %s22
      %s25 = sphi 0, %s23
      %s26 = sphi 0, %s24
      %s38 = sphi 0, %s40
      %s41 = sphi 0, %s38
      %s42 = sphi 0, %s41
      %s58 = sphi 0, %s42
      %s68 = sphi 0, %s70
      %s71 = sphi 0, %s68
      %s72 = sphi 0, %s71
      %s88 = sphi 0, %s72
      %s98 = sphi 0, %s100
      %s101 = sphi 0, %s98
      %s102 = sphi 0, %s101
      %s118 = sphi 0, %s102
      %s122 = sphi 0, %s122
      %s124 = sphi 0, %s122
      %s125 = sphi 0, %s124
      %s139 = sphi 0, %s125
      %s143 = sphi 0, %s143
      %s145 = sphi 0, %s143
      %s146 = sphi 0, %s145
      %s160 = sphi 0, %s146
      %s168 = sphi 0, %s170
      %s171 = sphi 0, %s168
      %s172 = sphi 0, %s171
      %s188 = sphi 0, %s172
    $region4: #{tpu_custom_call.1} parent=1 // loop_header_branch
      %17 = sbr.rel (%p15) target = $region8
    $region5: #{tpu_custom_call.1} parent=1 // loop_body
      %s19 = ssub.s32 %s14, 1
      %s20 = ssub.s32 %s14, 2
      %s27 = sadd.s32 1, %s22
      %p28 = scmp.ge.s32.totalorder %s27, 32
      %s29 = scalar_select %p28, 0, %s27
      %s30 = sadd.s32 1, %s21
      %s31 = scalar_select %p28, %s30, %s21
      %p32 = scmp.ge.s32.totalorder %s31, 2
      %s33 = scalar_select %p32, 0, %s31
      %s34 = ssub.s32 %s21, %s33
      %s35 = ssub.s32 %s22, %s29
      %s36 = sor.u32 %s34, %s35
      %p37 = scmp.eq.s32.totalorder %s36, 0
      %s39 = sadd.s32 %s38, 1
      %s40 = scalar_select %p37, %s38, %s39
      %p43 = pneg %p37
      %p44 = scmp.eq.s32.totalorder %s14, 63
      %p45 = por %p43, %p44
      %p46 = scmp.ne.s32.totalorder %s38, %s41
      %p47 = scmp.eq.s32.totalorder %s14, 0
      %p48 = por %p46, %p47
      %p49 = scmp.ne.s32.totalorder %s38, %s41
      %p50 = scmp.eq.s32.totalorder %s19, 63
      %p51 = por %p49, %p50
      %p52 = scmp.ne.s32.totalorder %s41, %s42
      %p53 = scmp.eq.s32.totalorder %s19, 0
      %p54 = por %p52, %p53
      %p55 = scmp.ne.s32.totalorder %s41, %s42
      %p56 = scmp.eq.s32.totalorder %s20, 63
      %p57 = por %p55, %p56
      %p59 = scmp.ne.s32.totalorder %s42, %s58
      %p60 = scmp.eq.s32.totalorder %s20, 0
      %p61 = por %p59, %p60
      %s62 = sadd.s32 %s22, 1
      %s63 = sadd.s32 %s29, 1
      %s64 = ssub.s32 %s21, %s33
      %s65 = ssub.s32 %s62, %s63
      %s66 = sor.u32 %s64, %s65
      %p67 = scmp.eq.s32.totalorder %s66, 0
      %s69 = sadd.s32 %s68, 1
      %s70 = scalar_select %p67, %s68, %s69
      %p73 = pneg %p67
      %p74 = scmp.eq.s32.totalorder %s14, 63
      %p75 = por %p73, %p74
      %p76 = scmp.ne.s32.totalorder %s68, %s71
      %p77 = scmp.eq.s32.totalorder %s14, 0
      %p78 = por %p76, %p77
      %p79 = scmp.ne.s32.totalorder %s68, %s71
      %p80 = scmp.eq.s32.totalorder %s19, 63
      %p81 = por %p79, %p80
      %p82 = scmp.ne.s32.totalorder %s71, %s72
      %p83 = scmp.eq.s32.totalorder %s19, 0
      %p84 = por %p82, %p83
      %p85 = scmp.ne.s32.totalorder %s71, %s72
      %p86 = scmp.eq.s32.totalorder %s20, 63
      %p87 = por %p85, %p86
      %p89 = scmp.ne.s32.totalorder %s72, %s88
      %p90 = scmp.eq.s32.totalorder %s20, 0
      %p91 = por %p89, %p90
      %s92 = sadd.s32 %s22, 2
      %s93 = sadd.s32 %s29, 2
      %s94 = ssub.s32 %s21, %s33
      %s95 = ssub.s32 %s92, %s93
      %s96 = sor.u32 %s94, %s95
      %p97 = scmp.eq.s32.totalorder %s96, 0
      %s99 = sadd.s32 %s98, 1
      %s100 = scalar_select %p97, %s98, %s99
      %p103 = pneg %p97
      %p104 = scmp.eq.s32.totalorder %s14, 63
      %p105 = por %p103, %p104
      %p106 = scmp.ne.s32.totalorder %s98, %s101
      %p107 = scmp.eq.s32.totalorder %s14, 0
      %p108 = por %p106, %p107
      %p109 = scmp.ne.s32.totalorder %s98, %s101
      %p110 = scmp.eq.s32.totalorder %s19, 63
      %p111 = por %p109, %p110
      %p112 = scmp.ne.s32.totalorder %s101, %s102
      %p113 = scmp.eq.s32.totalorder %s19, 0
      %p114 = por %p112, %p113
      %p115 = scmp.ne.s32.totalorder %s101, %s102
      %p116 = scmp.eq.s32.totalorder %s20, 63
      %p117 = por %p115, %p116
      %p119 = scmp.ne.s32.totalorder %s102, %s118
      %p120 = scmp.eq.s32.totalorder %s20, 0
      %p121 = por %p119, %p120
      %s123 = sadd.s32 %s122, 1
      %p126 = scmp.eq.s32.totalorder %s14, 63
      %p127 = scmp.ne.s32.totalorder %s122, %s124
      %p128 = scmp.eq.s32.totalorder %s14, 0
      %p129 = por %p127, %p128
      %p130 = scmp.ne.s32.totalorder %s122, %s124
      %p131 = scmp.eq.s32.totalorder %s19, 63
      %p132 = por %p130, %p131
      %p133 = scmp.ne.s32.totalorder %s124, %s125
      %p134 = scmp.eq.s32.totalorder %s19, 0
      %p135 = por %p133, %p134
      %p136 = scmp.ne.s32.totalorder %s124, %s125
      %p137 = scmp.eq.s32.totalorder %s20, 63
      %p138 = por %p136, %p137
      %p140 = scmp.ne.s32.totalorder %s125, %s139
      %p141 = scmp.eq.s32.totalorder %s20, 0
      %p142 = por %p140, %p141
      %s144 = sadd.s32 %s143, 1
      %p147 = scmp.eq.s32.totalorder %s14, 63
      %p148 = scmp.ne.s32.totalorder %s143, %s145
      %p149 = scmp.eq.s32.totalorder %s14, 0
      %p150 = por %p148, %p149
      %p151 = scmp.ne.s32.totalorder %s143, %s145
      %p152 = scmp.eq.s32.totalorder %s19, 63
      %p153 = por %p151, %p152
      %p154 = scmp.ne.s32.totalorder %s145, %s146
      %p155 = scmp.eq.s32.totalorder %s19, 0
      %p156 = por %p154, %p155
      %p157 = scmp.ne.s32.totalorder %s145, %s146
      %p158 = scmp.eq.s32.totalorder %s20, 63
      %p159 = por %p157, %p158
      %p161 = scmp.ne.s32.totalorder %s146, %s160
      %p162 = scmp.eq.s32.totalorder %s20, 0
      %p163 = por %p161, %p162
      %s164 = ssub.s32 %s21, %s33
      %s165 = ssub.s32 %s22, %s29
      %s166 = sor.u32 %s164, %s165
      %p167 = scmp.eq.s32.totalorder %s166, 0
      %s169 = sadd.s32 %s168, 1
      %s170 = scalar_select %p167, %s168, %s169
      %p173 = pneg %p167
      %p174 = scmp.eq.s32.totalorder %s14, 63
      %p175 = por %p173, %p174
      %p176 = scmp.ne.s32.totalorder %s168, %s171
      %p177 = scmp.eq.s32.totalorder %s14, 0
      %p178 = por %p176, %p177
      %p179 = scmp.ne.s32.totalorder %s168, %s171
      %p180 = scmp.eq.s32.totalorder %s19, 63
      %p181 = por %p179, %p180
      %p182 = scmp.ne.s32.totalorder %s171, %s172
      %p183 = scmp.eq.s32.totalorder %s19, 0
      %p184 = por %p182, %p183
      %p185 = scmp.ne.s32.totalorder %s171, %s172
      %p186 = scmp.eq.s32.totalorder %s20, 63
      %p187 = por %p185, %p186
      %p189 = scmp.ne.s32.totalorder %s172, %s188
      %p190 = scmp.eq.s32.totalorder %s20, 0
      %p191 = por %p189, %p190
      %p192 = scmp.le.s32.totalorder 1, %s14
      %p193 = scmp.lt.s32.totalorder %s14, 65
      %p194 = pnand %p192, %p193
      %p195 = pneg %p194
      // Predicated region
      $region9: #{tpu_custom_call.1} parent=5 // pred_check
        _
      $region10: #{tpu_custom_call.1} parent=5 // pred_check_branch
        %197 = sbr.rel (%p194) target = $region12
      $region11: #{tpu_custom_call.1} parent=5 // pred_region
        %s198 = ssub.s32 %s14, 1
        // Predicated region
        $region13: #{tpu_custom_call.1} parent=11 // pred_check
          %p199 = pneg %p135
        $region14: #{tpu_custom_call.1} parent=11 // pred_check_branch
          %201 = sbr.rel (%p199) target = $region16
        $region15: #{tpu_custom_call.1} parent=11 // pred_region
          _
        $region16: #{tpu_custom_call.1} parent=11 // pred_fallthru
          _
        // Predicated region
        $region17: #{tpu_custom_call.1} parent=11 // pred_check
          %p202 = pneg %p156
        $region18: #{tpu_custom_call.1} parent=11 // pred_check_branch
          %204 = sbr.rel (%p202) target = $region20
        $region19: #{tpu_custom_call.1} parent=11 // pred_region
          _
        $region20: #{tpu_custom_call.1} parent=11 // pred_fallthru
          _
      $region12: #{tpu_custom_call.1} parent=5 // pred_fallthru
        _
      %p205 = scmp.lt.s32.totalorder %s14, 64
      // Predicated region
      $region21: #{tpu_custom_call.1} parent=5 // pred_check
        %p206 = pneg %p205
      $region22: #{tpu_custom_call.1} parent=5 // pred_check_branch
        %208 = sbr.rel (%p206) target = $region24
      $region23: #{tpu_custom_call.1} parent=5 // pred_region
        // Predicated region
        $region25: #{tpu_custom_call.1} parent=23 // pred_check
          %p209 = pneg %p48
        $region26: #{tpu_custom_call.1} parent=23 // pred_check_branch
          %211 = sbr.rel (%p209) target = $region28
        $region27: #{tpu_custom_call.1} parent=23 // pred_region
          %p212 = scmp.lt.s32.totalorder %s21, 1
          %s213 = scalar_select %p212, %s21, 1
          %p214 = scmp.lt.s32.totalorder %s22, 33
          %s215 = scalar_select %p214, %s22, 33
          %s216 = smul.addr %s215, 5
          %s217 = smul.addr %s213, 170
          %s218 = sadd.s32 %s216, %s217
          %s219 = smul.addr %s218, 4
          %s220 = scalar_lea.vmem %s0, %s219
        $region28: #{tpu_custom_call.1} parent=23 // pred_fallthru
          _
        // Predicated region
        $region29: #{tpu_custom_call.1} parent=23 // pred_check
          %p221 = pneg %p78
        $region30: #{tpu_custom_call.1} parent=23 // pred_check_branch
          %223 = sbr.rel (%p221) target = $region32
        $region31: #{tpu_custom_call.1} parent=23 // pred_region
          %s224 = sadd.s32 %s22, 1
          %p225 = scmp.lt.s32.totalorder %s21, 1
          %s226 = scalar_select %p225, %s21, 1
          %p227 = scmp.lt.s32.totalorder %s224, 33
          %s228 = scalar_select %p227, %s224, 33
          %s229 = smul.addr %s228, 5
          %s230 = smul.addr %s226, 170
          %s231 = sadd.s32 %s229, %s230
          %s232 = smul.addr %s231, 4
          %s233 = scalar_lea.vmem %s1, %s232
          %s234 = sadd.s32 %s22, 1
        $region32: #{tpu_custom_call.1} parent=23 // pred_fallthru
          _
        // Predicated region
        $region33: #{tpu_custom_call.1} parent=23 // pred_check
          %p235 = pneg %p108
        $region34: #{tpu_custom_call.1} parent=23 // pred_check_branch
          %237 = sbr.rel (%p235) target = $region36
        $region35: #{tpu_custom_call.1} parent=23 // pred_region
          %s238 = sadd.s32 %s22, 2
          %p239 = scmp.lt.s32.totalorder %s21, 1
          %s240 = scalar_select %p239, %s21, 1
          %p241 = scmp.lt.s32.totalorder %s238, 33
          %s242 = scalar_select %p241, %s238, 33
          %s243 = smul.addr %s242, 5
          %s244 = smul.addr %s240, 170
          %s245 = sadd.s32 %s243, %s244
          %s246 = smul.addr %s245, 4
          %s247 = scalar_lea.vmem %s2, %s246
          %s248 = sadd.s32 %s22, 2
        $region36: #{tpu_custom_call.1} parent=23 // pred_fallthru
          _
      $region24: #{tpu_custom_call.1} parent=5 // pred_fallthru
        _
      %p249 = scmp.le.s32.totalorder 1, %s14
      %p250 = scmp.lt.s32.totalorder %s14, 65
      %p251 = pnand %p249, %p250
      %p252 = pneg %p251
      // Predicated region
      $region37: #{tpu_custom_call.1} parent=5 // pred_check
        _
      $region38: #{tpu_custom_call.1} parent=5 // pred_check_branch
        %254 = sbr.rel (%p251) target = $region40
      $region39: #{tpu_custom_call.1} parent=5 // pred_region
        %s255 = ssub.s32 %s14, 1
        %p256 = scmp.lt.s32.totalorder %s23, 1
        %s257 = scalar_select %p256, %s23, 1
        %p258 = scmp.lt.s32.totalorder %s24, 33
        %s259 = scalar_select %p258, %s24, 33
        %s260 = smul.addr %s259, 5
        %s261 = smul.addr %s257, 170
        %s262 = sadd.s32 %s260, %s261
        %s263 = smul.addr %s262, 4
        %s264 = scalar_lea.vmem %s0, %s263
        %p265 = pneg %p54
        %p266 = pneg %p51
        %s267 = sadd.s32 %s24, 1
        %p268 = scmp.lt.s32.totalorder %s23, 1
        %s269 = scalar_select %p268, %s23, 1
        %p270 = scmp.lt.s32.totalorder %s267, 33
        %s271 = scalar_select %p270, %s267, 33
        %s272 = smul.addr %s271, 5
        %s273 = smul.addr %s269, 170
        %s274 = sadd.s32 %s272, %s273
        %s275 = smul.addr %s274, 4
        %s276 = scalar_lea.vmem %s1, %s275
        %p277 = pneg %p84
        %p278 = pneg %p81
        %s279 = sadd.s32 %s24, 2
        %p280 = scmp.lt.s32.totalorder %s23, 1
        %s281 = scalar_select %p280, %s23, 1
        %p282 = scmp.lt.s32.totalorder %s279, 33
        %s283 = scalar_select %p282, %s279, 33
        %s284 = smul.addr %s283, 5
        %s285 = smul.addr %s281, 170
        %s286 = sadd.s32 %s284, %s285
        %s287 = smul.addr %s286, 4
        %s288 = scalar_lea.vmem %s2, %s287
        %p289 = pneg %p114
        %p290 = pneg %p111
        %p291 = pneg %p135
        %p292 = pneg %p132
        %p293 = pneg %p156
        %p294 = pneg %p153
        %p295 = pneg %p184
        %p296 = pneg %p181
        %s297 = sand.u32 %s171, 1
        %s298 = scalar_lea.sflag [#allocation3], %s297
        %s299 = sand.u32 %s171, 1
        %s300 = smul.addr %s299, 16
        %s301 = scalar_lea.vmem [#allocation2], %s300
        %p302 = scmp.lt.s32.totalorder %s23, 1
        %s303 = scalar_select %p302, %s23, 1
        %p304 = scmp.lt.s32.totalorder %s24, 33
        %s305 = scalar_select %p304, %s24, 33
        %s306 = smul.addr %s305, 5
        %s307 = smul.addr %s303, 170
        %s308 = sadd.s32 %s306, %s307
        %s309 = smul.addr %s308, 4
        %s310 = scalar_lea.vmem %s0, %s309
        %s311 = sadd.s32 %s24, 1
        %p312 = scmp.lt.s32.totalorder %s23, 1
        %s313 = scalar_select %p312, %s23, 1
        %p314 = scmp.lt.s32.totalorder %s311, 33
        %s315 = scalar_select %p314, %s311, 33
        %s316 = smul.addr %s315, 5
        %s317 = smul.addr %s313, 170
        %s318 = sadd.s32 %s316, %s317
        %s319 = smul.addr %s318, 4
        %s320 = scalar_lea.vmem %s1, %s319
        %s321 = sadd.s32 %s24, 1
        %s322 = sadd.s32 %s24, 2
        %p323 = scmp.lt.s32.totalorder %s23, 1
        %s324 = scalar_select %p323, %s23, 1
        %p325 = scmp.lt.s32.totalorder %s322, 33
        %s326 = scalar_select %p325, %s322, 33
        %s327 = smul.addr %s326, 5
        %s328 = smul.addr %s324, 170
        %s329 = sadd.s32 %s327, %s328
        %s330 = smul.addr %s329, 4
        %s331 = scalar_lea.vmem %s2, %s330
        %s332 = sadd.s32 %s24, 2
        %v334 = vld [vmem:[%s310] sm:$0xf]
        %v335 = vld [vmem:[%s310 + $0x4] sm:$0xf]
        %v336 = vld [vmem:[%s310 + $0x8] sm:$0xf]
        %v337 = vld [vmem:[%s310 + $0xc] sm:$0xf]
        %v338 = vld [vmem:[%s3] sm:$0x3]
        %v339 = vld [vmem:[%s310 + $0x10] sm:$0x1]
        %s340 = scalar_lea.vmem %s3, 2
        %v341 = vld [vmem:[%s340] sm:$0x3]
        %v347 = vunpack.c.l.b16 %v334
        %v348 = vunpack.c.l.b16 %v335
        %v349 = vunpack.c.l.b16 %v336
        %v350 = vunpack.c.l.b16 %v337
        %v351 = vunpack.c.l.b16 %v339
        %v352 = vpack.c.b16 %v348, %v347
        %v353 = vpack.c.b16 %v350, %v349
        %v354 = vpack.c.b16 %v351, %v351
        %vm355 = vsmask.f32 7424
        %v357 = vshrl.u32 %v352, 16
        %v359 = vshll.u32 %v352, 16
        %v361 = vrot.slane %v359, 1
        %v362 = vor.u32 %v357, %v361
        %v364 = vshll.u32 %v353, 16
        %v366 = vrot.slane %v364, 1
        %v367 = vsel %vm355, %v362, %v366
        %v368 = vshrl.u32 %v353, 16
        %v370 = vor.u32 %v368, %v366
        %v372 = vshll.u32 %v354, 16
        %v374 = vrot.slane %v372, 1
        %v375 = vsel %vm355, %v370, %v374
        %vm376 = vcmask 23552
        %v378 = vsel %vm376, %v367, 0
        %v381 = vsel %vm376, %v375, 0
        %vm383 = vcmask 1040384
        %vm384 = vcmask 1041408
        %v385 = vsel %vm383, 4294967295, 65535
        %v386 = vsel %vm384, %v385, 0
        %v388 = vand.u32 %v341, %v386
        %390 = vmatprep.subr.bf16.mxu0 0
        %391 = vmatpush1.bf16.msra.mxu0 %v388
        %392 = vmatprep.subr.bf16.mxu0 0
        %393 = vmatpush1.bf16.msra.mxu0 0
        %394 = vmatprep.subr.bf16.mxu0 0
        %395 = vmatpush1.bf16.msra.mxu0 0
        %396 = vmatprep.subr.bf16.mxu0 0
        %397 = vmatpush1.bf16.msra.mxu0 0
        %398 = vmatprep.subr.bf16.mxu0 0
        %399 = vmatpush1.bf16.msra.mxu0 0
        %400 = vmatprep.subr.bf16.mxu0 0
        %401 = vmatpush1.bf16.msra.mxu0 0
        %402 = vmatprep.subr.bf16.mxu0 0
        %403 = vmatpush1.bf16.msra.mxu0 0
        %404 = vmatprep.subr.bf16.mxu0 0
        %405 = vmatpush1.bf16.msra.mxu0 0
        %406 = vmatprep.subr.bf16.mxu0 0
        %407 = vmatpush1.bf16.msra.mxu0 0
        %408 = vmatprep.subr.bf16.mxu0 0
        %409 = vmatpush1.bf16.msra.mxu0 0
        %410 = vmatprep.subr.bf16.mxu0 0
        %411 = vmatpush1.bf16.msra.mxu0 0
        %412 = vmatprep.subr.bf16.mxu0 0
        %413 = vmatpush1.bf16.msra.mxu0 0
        %414 = vmatprep.subr.bf16.mxu0 0
        %415 = vmatpush1.bf16.msra.mxu0 0
        %416 = vmatprep.subr.bf16.mxu0 0
        %417 = vmatpush1.bf16.msra.mxu0 0
        %418 = vmatprep.subr.bf16.mxu0 0
        %419 = vmatpush1.bf16.msra.mxu0 0
        %420 = vmatprep.subr.bf16.mxu0 0
        %421 = vmatpush1.bf16.msra.mxu0 0
        %422 = vmatprep.mubr.bf16.mxu0 0
        %423 = vmatmul.mubr.bf16.gmra.mrb[0].mxu0 %v378
        %v424 = vpop.f32.mrb[0].mxu0
        %v425 = vadd.f32 0.0, %v424
        %v426 = vpop.f32.mrb[0].mxu0
        %v427 = vpop.f32.mrb[0].mxu0
        %v428 = vadd.f32 0.0, %v427
        %v429 = vpop.f32.mrb[0].mxu0
        %430 = vmatprep.mubr.bf16.mxu0 0
        %431 = vmatmul.mubr.bf16.gmra.mrb[0].mxu0 %v381
        %v432 = vpop.f32.mrb[0].mxu0
        %v433 = vadd.f32 0.0, %v432
        %v434 = vpop.f32.mrb[0].mxu0
        %v435 = vpop.f32.mrb[0].mxu0
        %v436 = vadd.f32 0.0, %v435
        %v437 = vpop.f32.mrb[0].mxu0
        %438 = vdwg.mxu0
        %v439 = vsel %vm376, %v352, 0
        %v441 = vsel %vm376, %v353, 0
        %v444 = vand.u32 %v338, %v386
        %446 = vmatprep.subr.bf16.mxu0 0
        %447 = vmatpush1.bf16.msra.mxu0 %v444
        %448 = vmatprep.subr.bf16.mxu0 0
        %449 = vmatpush1.bf16.msra.mxu0 0
        %450 = vmatprep.subr.bf16.mxu0 0
        %451 = vmatpush1.bf16.msra.mxu0 0
        %452 = vmatprep.subr.bf16.mxu0 0
        %453 = vmatpush1.bf16.msra.mxu0 0
        %454 = vmatprep.subr.bf16.mxu0 0
        %455 = vmatpush1.bf16.msra.mxu0 0
        %456 = vmatprep.subr.bf16.mxu0 0
        %457 = vmatpush1.bf16.msra.mxu0 0
        %458 = vmatprep.subr.bf16.mxu0 0
        %459 = vmatpush1.bf16.msra.mxu0 0
        %460 = vmatprep.subr.bf16.mxu0 0
        %461 = vmatpush1.bf16.msra.mxu0 0
        %462 = vmatprep.subr.bf16.mxu0 0
        %463 = vmatpush1.bf16.msra.mxu0 0
        %464 = vmatprep.subr.bf16.mxu0 0
        %465 = vmatpush1.bf16.msra.mxu0 0
        %466 = vmatprep.subr.bf16.mxu0 0
        %467 = vmatpush1.bf16.msra.mxu0 0
        %468 = vmatprep.subr.bf16.mxu0 0
        %469 = vmatpush1.bf16.msra.mxu0 0
        %470 = vmatprep.subr.bf16.mxu0 0
        %471 = vmatpush1.bf16.msra.mxu0 0
        %472 = vmatprep.subr.bf16.mxu0 0
        %473 = vmatpush1.bf16.msra.mxu0 0
        %474 = vmatprep.subr.bf16.mxu0 0
        %475 = vmatpush1.bf16.msra.mxu0 0
        %476 = vmatprep.subr.bf16.mxu0 0
        %477 = vmatpush1.bf16.msra.mxu0 0
        %478 = vmatprep.mubr.bf16.mxu0 0
        %479 = vmatmul.mubr.bf16.gmra.mrb[0].mxu0 %v439
        %v480 = vpop.f32.mrb[0].mxu0
        %v481 = vadd.f32 %v425, %v480
        %v482 = vpop.f32.mrb[0].mxu0
        %v483 = vpop.f32.mrb[0].mxu0
        %v484 = vadd.f32 %v428, %v483
        %v485 = vpop.f32.mrb[0].mxu0
        %486 = vmatprep.mubr.bf16.mxu0 0
        %487 = vmatmul.mubr.bf16.gmra.mrb[0].mxu0 %v441
        %v488 = vpop.f32.mrb[0].mxu0
        %v489 = vadd.f32 %v433, %v488
        %v490 = vpop.f32.mrb[0].mxu0
        %v491 = vpop.f32.mrb[0].mxu0
        %v492 = vadd.f32 %v436, %v491
        %v493 = vpop.f32.mrb[0].mxu0
        %494 = vdwg.mxu0
        %v495 = vld [vmem:[%s310] sm:$0xe]
        %s496 = scalar_lea.vmem %s3, 4
        %v497 = vld [vmem:[%s496] sm:$0x3]
        %v499 = vunpack.c.l.b16 %v495
        %v500 = vpack.c.b16 %v348, %v499
        %vm501 = vcmask 1046528
        %v502 = vrot.slane %v500, 1
        %v503 = vrot.slane %v353, 1
        %v504 = vsel %vm501, %v502, %v503
        %v505 = vrot.slane %v354, 1
        %v506 = vsel %vm501, %v503, %v505
        %v508 = vsel %vm376, %v504, 0
        %v511 = vsel %vm376, %v506, 0
        %v514 = vand.u32 %v497, %v386
        %516 = vmatprep.subr.bf16.mxu0 0
        %517 = vmatpush1.bf16.msra.mxu0 %v514
        %518 = vmatprep.subr.bf16.mxu0 0
        %519 = vmatpush1.bf16.msra.mxu0 0
        %520 = vmatprep.subr.bf16.mxu0 0
        %521 = vmatpush1.bf16.msra.mxu0 0
        %522 = vmatprep.subr.bf16.mxu0 0
        %523 = vmatpush1.bf16.msra.mxu0 0
        %524 = vmatprep.subr.bf16.mxu0 0
        %525 = vmatpush1.bf16.msra.mxu0 0
        %526 = vmatprep.subr.bf16.mxu0 0
        %527 = vmatpush1.bf16.msra.mxu0 0
        %528 = vmatprep.subr.bf16.mxu0 0
        %529 = vmatpush1.bf16.msra.mxu0 0
        %530 = vmatprep.subr.bf16.mxu0 0
        %531 = vmatpush1.bf16.msra.mxu0 0
        %532 = vmatprep.subr.bf16.mxu0 0
        %533 = vmatpush1.bf16.msra.mxu0 0
        %534 = vmatprep.subr.bf16.mxu0 0
        %535 = vmatpush1.bf16.msra.mxu0 0
        %536 = vmatprep.subr.bf16.mxu0 0
        %537 = vmatpush1.bf16.msra.mxu0 0
        %538 = vmatprep.subr.bf16.mxu0 0
        %539 = vmatpush1.bf16.msra.mxu0 0
        %540 = vmatprep.subr.bf16.mxu0 0
        %541 = vmatpush1.bf16.msra.mxu0 0
        %542 = vmatprep.subr.bf16.mxu0 0
        %543 = vmatpush1.bf16.msra.mxu0 0
        %544 = vmatprep.subr.bf16.mxu0 0
        %545 = vmatpush1.bf16.msra.mxu0 0
        %546 = vmatprep.subr.bf16.mxu0 0
        %547 = vmatpush1.bf16.msra.mxu0 0
        %548 = vmatprep.mubr.bf16.mxu0 0
        %549 = vmatmul.mubr.bf16.gmra.mrb[0].mxu0 %v508
        %v550 = vpop.f32.mrb[0].mxu0
        %v551 = vadd.f32 0.0, %v550
        %v552 = vpop.f32.mrb[0].mxu0
        %v553 = vpop.f32.mrb[0].mxu0
        %v554 = vadd.f32 0.0, %v553
        %v555 = vpop.f32.mrb[0].mxu0
        %556 = vmatprep.mubr.bf16.mxu0 0
        %557 = vmatmul.mubr.bf16.gmra.mrb[0].mxu0 %v511
        %v558 = vpop.f32.mrb[0].mxu0
        %v559 = vadd.f32 0.0, %v558
        %v560 = vpop.f32.mrb[0].mxu0
        %v561 = vpop.f32.mrb[0].mxu0
        %v562 = vadd.f32 0.0, %v561
        %v563 = vpop.f32.mrb[0].mxu0
        %564 = vdwg.mxu0
        %v565 = vadd.f32 %v481, %v551
        %v566 = vadd.f32 %v484, %v554
        %v567 = vadd.f32 %v489, %v559
        %v568 = vadd.f32 %v492, %v562
        %v569 = vld [vmem:[%s320] sm:$0xf]
        %v570 = vld [vmem:[%s320 + $0x4] sm:$0xf]
        %v571 = vld [vmem:[%s320 + $0x8] sm:$0xf]
        %v572 = vld [vmem:[%s320 + $0xc] sm:$0xf]
        %s573 = scalar_lea.vmem %s3, 6
        %v574 = vld [vmem:[%s573] sm:$0x3]
        %v579 = vunpack.c.l.b16 %v569
        %v580 = vunpack.c.l.b16 %v570
        %v581 = vunpack.c.l.b16 %v571
        %v582 = vunpack.c.l.b16 %v572
        %v583 = vpack.c.b16 %v580, %v579
        %v584 = vpack.c.b16 %v582, %v581
        %v586 = vsel %vm376, %v583, 0
        %v589 = vsel %vm376, %v584, 0
        %v592 = vand.u32 %v574, %v386
        %594 = vmatprep.subr.bf16.mxu0 0
        %595 = vmatpush1.bf16.msra.mxu0 %v592
        %596 = vmatprep.subr.bf16.mxu0 0
        %597 = vmatpush1.bf16.msra.mxu0 0
        %598 = vmatprep.subr.bf16.mxu0 0
        %599 = vmatpush1.bf16.msra.mxu0 0
        %600 = vmatprep.subr.bf16.mxu0 0
        %601 = vmatpush1.bf16.msra.mxu0 0
        %602 = vmatprep.subr.bf16.mxu0 0
        %603 = vmatpush1.bf16.msra.mxu0 0
        %604 = vmatprep.subr.bf16.mxu0 0
        %605 = vmatpush1.bf16.msra.mxu0 0
        %606 = vmatprep.subr.bf16.mxu0 0
        %607 = vmatpush1.bf16.msra.mxu0 0
        %608 = vmatprep.subr.bf16.mxu0 0
        %609 = vmatpush1.bf16.msra.mxu0 0
        %610 = vmatprep.subr.bf16.mxu0 0
        %611 = vmatpush1.bf16.msra.mxu0 0
        %612 = vmatprep.subr.bf16.mxu0 0
        %613 = vmatpush1.bf16.msra.mxu0 0
        %614 = vmatprep.subr.bf16.mxu0 0
        %615 = vmatpush1.bf16.msra.mxu0 0
        %616 = vmatprep.subr.bf16.mxu0 0
        %617 = vmatpush1.bf16.msra.mxu0 0
        %618 = vmatprep.subr.bf16.mxu0 0
        %619 = vmatpush1.bf16.msra.mxu0 0
        %620 = vmatprep.subr.bf16.mxu0 0
        %621 = vmatpush1.bf16.msra.mxu0 0
        %622 = vmatprep.subr.bf16.mxu0 0
        %623 = vmatpush1.bf16.msra.mxu0 0
        %624 = vmatprep.subr.bf16.mxu0 0
        %625 = vmatpush1.bf16.msra.mxu0 0
        %626 = vmatprep.mubr.bf16.mxu0 0
        %627 = vmatmul.mubr.bf16.gmra.mrb[0].mxu0 %v586
        %v628 = vpop.f32.mrb[0].mxu0
        %v629 = vadd.f32 0.0, %v628
        %v630 = vpop.f32.mrb[0].mxu0
        %v631 = vpop.f32.mrb[0].mxu0
        %v632 = vadd.f32 0.0, %v631
        %v633 = vpop.f32.mrb[0].mxu0
        %634 = vmatprep.mubr.bf16.mxu0 0
        %635 = vmatmul.mubr.bf16.gmra.mrb[0].mxu0 %v589
        %v636 = vpop.f32.mrb[0].mxu0
        %v637 = vadd.f32 0.0, %v636
        %v638 = vpop.f32.mrb[0].mxu0
        %v639 = vpop.f32.mrb[0].mxu0
        %v640 = vadd.f32 0.0, %v639
        %v641 = vpop.f32.mrb[0].mxu0
        %642 = vdwg.mxu0
        %v643 = vadd.f32 %v565, %v629
        %v644 = vadd.f32 %v566, %v632
        %v645 = vadd.f32 %v567, %v637
        %v646 = vadd.f32 %v568, %v640
        %v647 = vld [vmem:[%s320] sm:$0xf]
        %v648 = vld [vmem:[%s320 + $0x4] sm:$0xf]
        %v649 = vld [vmem:[%s320 + $0x8] sm:$0xf]
        %v650 = vld [vmem:[%s320 + $0xc] sm:$0xf]
        %v651 = vld [vmem:[%s320 + $0x10] sm:$0x1]
        %s652 = scalar_lea.vmem %s3, 8
        %v653 = vld [vmem:[%s652] sm:$0x3]
        %v659 = vunpack.c.l.b16 %v647
        %v660 = vunpack.c.l.b16 %v648
        %v661 = vunpack.c.l.b16 %v649
        %v662 = vunpack.c.l.b16 %v650
        %v663 = vunpack.c.l.b16 %v651
        %v664 = vpack.c.b16 %v660, %v659
        %v665 = vpack.c.b16 %v662, %v661
        %v666 = vpack.c.b16 %v663, %v663
        %v668 = vshrl.u32 %v664, 16
        %v670 = vshll.u32 %v664, 16
        %v672 = vrot.slane %v670, 1
        %v673 = vor.u32 %v668, %v672
        %v675 = vshll.u32 %v665, 16
        %v677 = vrot.slane %v675, 1
        %v678 = vsel %vm355, %v673, %v677
        %v679 = vshrl.u32 %v665, 16
        %v681 = vor.u32 %v679, %v677
        %v683 = vshll.u32 %v666, 16
        %v685 = vrot.slane %v683, 1
        %v686 = vsel %vm355, %v681, %v685
        %v688 = vsel %vm376, %v678, 0
        %v691 = vsel %vm376, %v686, 0
        %v694 = vand.u32 %v653, %v386
        %696 = vmatprep.subr.bf16.mxu0 0
        %697 = vmatpush1.bf16.msra.mxu0 %v694
        %698 = vmatprep.subr.bf16.mxu0 0
        %699 = vmatpush1.bf16.msra.mxu0 0
        %700 = vmatprep.subr.bf16.mxu0 0
        %701 = vmatpush1.bf16.msra.mxu0 0
        %702 = vmatprep.subr.bf16.mxu0 0
        %703 = vmatpush1.bf16.msra.mxu0 0
        %704 = vmatprep.subr.bf16.mxu0 0
        %705 = vmatpush1.bf16.msra.mxu0 0
        %706 = vmatprep.subr.bf16.mxu0 0
        %707 = vmatpush1.bf16.msra.mxu0 0
        %708 = vmatprep.subr.bf16.mxu0 0
        %709 = vmatpush1.bf16.msra.mxu0 0
        %710 = vmatprep.subr.bf16.mxu0 0
        %711 = vmatpush1.bf16.msra.mxu0 0
        %712 = vmatprep.subr.bf16.mxu0 0
        %713 = vmatpush1.bf16.msra.mxu0 0
        %714 = vmatprep.subr.bf16.mxu0 0
        %715 = vmatpush1.bf16.msra.mxu0 0
        %716 = vmatprep.subr.bf16.mxu0 0
        %717 = vmatpush1.bf16.msra.mxu0 0
        %718 = vmatprep.subr.bf16.mxu0 0
        %719 = vmatpush1.bf16.msra.mxu0 0
        %720 = vmatprep.subr.bf16.mxu0 0
        %721 = vmatpush1.bf16.msra.mxu0 0
        %722 = vmatprep.subr.bf16.mxu0 0
        %723 = vmatpush1.bf16.msra.mxu0 0
        %724 = vmatprep.subr.bf16.mxu0 0
        %725 = vmatpush1.bf16.msra.mxu0 0
        %726 = vmatprep.subr.bf16.mxu0 0
        %727 = vmatpush1.bf16.msra.mxu0 0
        %728 = vmatprep.mubr.bf16.mxu0 0
        %729 = vmatmul.mubr.bf16.gmra.mrb[0].mxu0 %v688
        %v730 = vpop.f32.mrb[0].mxu0
        %v731 = vadd.f32 0.0, %v730
        %v732 = vpop.f32.mrb[0].mxu0
        %v733 = vpop.f32.mrb[0].mxu0
        %v734 = vadd.f32 0.0, %v733
        %v735 = vpop.f32.mrb[0].mxu0
        %736 = vmatprep.mubr.bf16.mxu0 0
        %737 = vmatmul.mubr.bf16.gmra.mrb[0].mxu0 %v691
        %v738 = vpop.f32.mrb[0].mxu0
        %v739 = vadd.f32 0.0, %v738
        %v740 = vpop.f32.mrb[0].mxu0
        %v741 = vpop.f32.mrb[0].mxu0
        %v742 = vadd.f32 0.0, %v741
        %v743 = vpop.f32.mrb[0].mxu0
        %744 = vdwg.mxu0
        %v745 = vadd.f32 %v643, %v731
        %v746 = vadd.f32 %v644, %v734
        %v747 = vadd.f32 %v645, %v739
        %v748 = vadd.f32 %v646, %v742
        %v749 = vld [vmem:[%s320] sm:$0xe]
        %s750 = scalar_lea.vmem %s3, 10
        %v751 = vld [vmem:[%s750] sm:$0x3]
        %v753 = vunpack.c.l.b16 %v749
        %v754 = vpack.c.b16 %v660, %v753
        %v755 = vrot.slane %v754, 1
        %v756 = vrot.slane %v665, 1
        %v757 = vsel %vm501, %v755, %v756
        %v758 = vrot.slane %v666, 1
        %v759 = vsel %vm501, %v756, %v758
        %v761 = vsel %vm376, %v757, 0
        %v764 = vsel %vm376, %v759, 0
        %v767 = vand.u32 %v751, %v386
        %769 = vmatprep.subr.bf16.mxu0 0
        %770 = vmatpush1.bf16.msra.mxu0 %v767
        %771 = vmatprep.subr.bf16.mxu0 0
        %772 = vmatpush1.bf16.msra.mxu0 0
        %773 = vmatprep.subr.bf16.mxu0 0
        %774 = vmatpush1.bf16.msra.mxu0 0
        %775 = vmatprep.subr.bf16.mxu0 0
        %776 = vmatpush1.bf16.msra.mxu0 0
        %777 = vmatprep.subr.bf16.mxu0 0
        %778 = vmatpush1.bf16.msra.mxu0 0
        %779 = vmatprep.subr.bf16.mxu0 0
        %780 = vmatpush1.bf16.msra.mxu0 0
        %781 = vmatprep.subr.bf16.mxu0 0
        %782 = vmatpush1.bf16.msra.mxu0 0
        %783 = vmatprep.subr.bf16.mxu0 0
        %784 = vmatpush1.bf16.msra.mxu0 0
        %785 = vmatprep.subr.bf16.mxu0 0
        %786 = vmatpush1.bf16.msra.mxu0 0
        %787 = vmatprep.subr.bf16.mxu0 0
        %788 = vmatpush1.bf16.msra.mxu0 0
        %789 = vmatprep.subr.bf16.mxu0 0
        %790 = vmatpush1.bf16.msra.mxu0 0
        %791 = vmatprep.subr.bf16.mxu0 0
        %792 = vmatpush1.bf16.msra.mxu0 0
        %793 = vmatprep.subr.bf16.mxu0 0
        %794 = vmatpush1.bf16.msra.mxu0 0
        %795 = vmatprep.subr.bf16.mxu0 0
        %796 = vmatpush1.bf16.msra.mxu0 0
        %797 = vmatprep.subr.bf16.mxu0 0
        %798 = vmatpush1.bf16.msra.mxu0 0
        %799 = vmatprep.subr.bf16.mxu0 0
        %800 = vmatpush1.bf16.msra.mxu0 0
        %801 = vmatprep.mubr.bf16.mxu0 0
        %802 = vmatmul.mubr.bf16.gmra.mrb[0].mxu0 %v761
        %v803 = vpop.f32.mrb[0].mxu0
        %v804 = vadd.f32 0.0, %v803
        %v805 = vpop.f32.mrb[0].mxu0
        %v806 = vpop.f32.mrb[0].mxu0
        %v807 = vadd.f32 0.0, %v806
        %v808 = vpop.f32.mrb[0].mxu0
        %809 = vmatprep.mubr.bf16.mxu0 0
        %810 = vmatmul.mubr.bf16.gmra.mrb[0].mxu0 %v764
        %v811 = vpop.f32.mrb[0].mxu0
        %v812 = vadd.f32 0.0, %v811
        %v813 = vpop.f32.mrb[0].mxu0
        %v814 = vpop.f32.mrb[0].mxu0
        %v815 = vadd.f32 0.0, %v814
        %v816 = vpop.f32.mrb[0].mxu0
        %817 = vdwg.mxu0
        %v818 = vadd.f32 %v745, %v804
        %v819 = vadd.f32 %v746, %v807
        %v820 = vadd.f32 %v747, %v812
        %v821 = vadd.f32 %v748, %v815
        %v822 = vld [vmem:[%s331] sm:$0xf]
        %v823 = vld [vmem:[%s331 + $0x4] sm:$0xf]
        %v824 = vld [vmem:[%s331 + $0x8] sm:$0xf]
        %v825 = vld [vmem:[%s331 + $0xc] sm:$0xf]
        %s826 = scalar_lea.vmem %s3, 12
        %v827 = vld [vmem:[%s826] sm:$0x3]
        %v832 = vunpack.c.l.b16 %v822
        %v833 = vunpack.c.l.b16 %v823
        %v834 = vunpack.c.l.b16 %v824
        %v835 = vunpack.c.l.b16 %v825
        %v836 = vpack.c.b16 %v833, %v832
        %v837 = vpack.c.b16 %v835, %v834
        %v839 = vsel %vm376, %v836, 0
        %v842 = vsel %vm376, %v837, 0
        %v845 = vand.u32 %v827, %v386
        %847 = vmatprep.subr.bf16.mxu0 0
        %848 = vmatpush1.bf16.msra.mxu0 %v845
        %849 = vmatprep.subr.bf16.mxu0 0
        %850 = vmatpush1.bf16.msra.mxu0 0
        %851 = vmatprep.subr.bf16.mxu0 0
        %852 = vmatpush1.bf16.msra.mxu0 0
        %853 = vmatprep.subr.bf16.mxu0 0
        %854 = vmatpush1.bf16.msra.mxu0 0
        %855 = vmatprep.subr.bf16.mxu0 0
        %856 = vmatpush1.bf16.msra.mxu0 0
        %857 = vmatprep.subr.bf16.mxu0 0
        %858 = vmatpush1.bf16.msra.mxu0 0
        %859 = vmatprep.subr.bf16.mxu0 0
        %860 = vmatpush1.bf16.msra.mxu0 0
        %861 = vmatprep.subr.bf16.mxu0 0
        %862 = vmatpush1.bf16.msra.mxu0 0
        %863 = vmatprep.subr.bf16.mxu0 0
        %864 = vmatpush1.bf16.msra.mxu0 0
        %865 = vmatprep.subr.bf16.mxu0 0
        %866 = vmatpush1.bf16.msra.mxu0 0
        %867 = vmatprep.subr.bf16.mxu0 0
        %868 = vmatpush1.bf16.msra.mxu0 0
        %869 = vmatprep.subr.bf16.mxu0 0
        %870 = vmatpush1.bf16.msra.mxu0 0
        %871 = vmatprep.subr.bf16.mxu0 0
        %872 = vmatpush1.bf16.msra.mxu0 0
        %873 = vmatprep.subr.bf16.mxu0 0
        %874 = vmatpush1.bf16.msra.mxu0 0
        %875 = vmatprep.subr.bf16.mxu0 0
        %876 = vmatpush1.bf16.msra.mxu0 0
        %877 = vmatprep.subr.bf16.mxu0 0
        %878 = vmatpush1.bf16.msra.mxu0 0
        %879 = vmatprep.mubr.bf16.mxu0 0
        %880 = vmatmul.mubr.bf16.gmra.mrb[0].mxu0 %v839
        %v881 = vpop.f32.mrb[0].mxu0
        %v882 = vadd.f32 0.0, %v881
        %v883 = vpop.f32.mrb[0].mxu0
        %v884 = vpop.f32.mrb[0].mxu0
        %v885 = vadd.f32 0.0, %v884
        %v886 = vpop.f32.mrb[0].mxu0
        %887 = vmatprep.mubr.bf16.mxu0 0
        %888 = vmatmul.mubr.bf16.gmra.mrb[0].mxu0 %v842
        %v889 = vpop.f32.mrb[0].mxu0
        %v890 = vadd.f32 0.0, %v889
        %v891 = vpop.f32.mrb[0].mxu0
        %v892 = vpop.f32.mrb[0].mxu0
        %v893 = vadd.f32 0.0, %v892
        %v894 = vpop.f32.mrb[0].mxu0
        %895 = vdwg.mxu0
        %v896 = vadd.f32 %v818, %v882
        %v897 = vadd.f32 %v819, %v885
        %v898 = vadd.f32 %v820, %v890
        %v899 = vadd.f32 %v821, %v893
        %v900 = vld [vmem:[%s331] sm:$0xf]
        %v901 = vld [vmem:[%s331 + $0x4] sm:$0xf]
        %v902 = vld [vmem:[%s331 + $0x8] sm:$0xf]
        %v903 = vld [vmem:[%s331 + $0xc] sm:$0xf]
        %v904 = vld [vmem:[%s331 + $0x10] sm:$0x1]
        %s905 = scalar_lea.vmem %s3, 14
        %v906 = vld [vmem:[%s905] sm:$0x3]
        %v912 = vunpack.c.l.b16 %v900
        %v913 = vunpack.c.l.b16 %v901
        %v914 = vunpack.c.l.b16 %v902
        %v915 = vunpack.c.l.b16 %v903
        %v916 = vunpack.c.l.b16 %v904
        %v917 = vpack.c.b16 %v913, %v912
        %v918 = vpack.c.b16 %v915, %v914
        %v919 = vpack.c.b16 %v916, %v916
        %v921 = vshrl.u32 %v917, 16
        %v923 = vshll.u32 %v917, 16
        %v925 = vrot.slane %v923, 1
        %v926 = vor.u32 %v921, %v925
        %v928 = vshll.u32 %v918, 16
        %v930 = vrot.slane %v928, 1
        %v931 = vsel %vm355, %v926, %v930
        %v932 = vshrl.u32 %v918, 16
        %v934 = vor.u32 %v932, %v930
        %v936 = vshll.u32 %v919, 16
        %v938 = vrot.slane %v936, 1
        %v939 = vsel %vm355, %v934, %v938
        %v941 = vsel %vm376, %v931, 0
        %v944 = vsel %vm376, %v939, 0
        %v947 = vand.u32 %v906, %v386
        %949 = vmatprep.subr.bf16.mxu0 0
        %950 = vmatpush1.bf16.msra.mxu0 %v947
        %951 = vmatprep.subr.bf16.mxu0 0
        %952 = vmatpush1.bf16.msra.mxu0 0
        %953 = vmatprep.subr.bf16.mxu0 0
        %954 = vmatpush1.bf16.msra.mxu0 0
        %955 = vmatprep.subr.bf16.mxu0 0
        %956 = vmatpush1.bf16.msra.mxu0 0
        %957 = vmatprep.subr.bf16.mxu0 0
        %958 = vmatpush1.bf16.msra.mxu0 0
        %959 = vmatprep.subr.bf16.mxu0 0
        %960 = vmatpush1.bf16.msra.mxu0 0
        %961 = vmatprep.subr.bf16.mxu0 0
        %962 = vmatpush1.bf16.msra.mxu0 0
        %963 = vmatprep.subr.bf16.mxu0 0
        %964 = vmatpush1.bf16.msra.mxu0 0
        %965 = vmatprep.subr.bf16.mxu0 0
        %966 = vmatpush1.bf16.msra.mxu0 0
        %967 = vmatprep.subr.bf16.mxu0 0
        %968 = vmatpush1.bf16.msra.mxu0 0
        %969 = vmatprep.subr.bf16.mxu0 0
        %970 = vmatpush1.bf16.msra.mxu0 0
        %971 = vmatprep.subr.bf16.mxu0 0
        %972 = vmatpush1.bf16.msra.mxu0 0
        %973 = vmatprep.subr.bf16.mxu0 0
        %974 = vmatpush1.bf16.msra.mxu0 0
        %975 = vmatprep.subr.bf16.mxu0 0
        %976 = vmatpush1.bf16.msra.mxu0 0
        %977 = vmatprep.subr.bf16.mxu0 0
        %978 = vmatpush1.bf16.msra.mxu0 0
        %979 = vmatprep.subr.bf16.mxu0 0
        %980 = vmatpush1.bf16.msra.mxu0 0
        %981 = vmatprep.mubr.bf16.mxu0 0
        %982 = vmatmul.mubr.bf16.gmra.mrb[0].mxu0 %v941
        %v983 = vpop.f32.mrb[0].mxu0
        %v984 = vadd.f32 0.0, %v983
        %v985 = vpop.f32.mrb[0].mxu0
        %v986 = vpop.f32.mrb[0].mxu0
        %v987 = vadd.f32 0.0, %v986
        %v988 = vpop.f32.mrb[0].mxu0
        %989 = vmatprep.mubr.bf16.mxu0 0
        %990 = vmatmul.mubr.bf16.gmra.mrb[0].mxu0 %v944
        %v991 = vpop.f32.mrb[0].mxu0
        %v992 = vadd.f32 0.0, %v991
        %v993 = vpop.f32.mrb[0].mxu0
        %v994 = vpop.f32.mrb[0].mxu0
        %v995 = vadd.f32 0.0, %v994
        %v996 = vpop.f32.mrb[0].mxu0
        %997 = vdwg.mxu0
        %v998 = vadd.f32 %v896, %v984
        %v999 = vadd.f32 %v897, %v987
        %v1000 = vadd.f32 %v898, %v992
        %v1001 = vadd.f32 %v899, %v995
        %v1002 = vld [vmem:[%s331] sm:$0xe]
        %s1003 = scalar_lea.vmem %s3, 16
        %v1004 = vld [vmem:[%s1003] sm:$0x3]
        %v1006 = vunpack.c.l.b16 %v1002
        %v1007 = vpack.c.b16 %v913, %v1006
        %v1008 = vrot.slane %v1007, 1
        %v1009 = vrot.slane %v918, 1
        %v1010 = vsel %vm501, %v1008, %v1009
        %v1011 = vrot.slane %v919, 1
        %v1012 = vsel %vm501, %v1009, %v1011
        %v1014 = vsel %vm376, %v1010, 0
        %v1017 = vsel %vm376, %v1012, 0
        %v1020 = vand.u32 %v1004, %v386
        %1022 = vmatprep.subr.bf16.mxu0 0
        %1023 = vmatpush1.bf16.msra.mxu0 %v1020
        %1024 = vmatprep.subr.bf16.mxu0 0
        %1025 = vmatpush1.bf16.msra.mxu0 0
        %1026 = vmatprep.subr.bf16.mxu0 0
        %1027 = vmatpush1.bf16.msra.mxu0 0
        %1028 = vmatprep.subr.bf16.mxu0 0
        %1029 = vmatpush1.bf16.msra.mxu0 0
        %1030 = vmatprep.subr.bf16.mxu0 0
        %1031 = vmatpush1.bf16.msra.mxu0 0
        %1032 = vmatprep.subr.bf16.mxu0 0
        %1033 = vmatpush1.bf16.msra.mxu0 0
        %1034 = vmatprep.subr.bf16.mxu0 0
        %1035 = vmatpush1.bf16.msra.mxu0 0
        %1036 = vmatprep.subr.bf16.mxu0 0
        %1037 = vmatpush1.bf16.msra.mxu0 0
        %1038 = vmatprep.subr.bf16.mxu0 0
        %1039 = vmatpush1.bf16.msra.mxu0 0
        %1040 = vmatprep.subr.bf16.mxu0 0
        %1041 = vmatpush1.bf16.msra.mxu0 0
        %1042 = vmatprep.subr.bf16.mxu0 0
        %1043 = vmatpush1.bf16.msra.mxu0 0
        %1044 = vmatprep.subr.bf16.mxu0 0
        %1045 = vmatpush1.bf16.msra.mxu0 0
        %1046 = vmatprep.subr.bf16.mxu0 0
        %1047 = vmatpush1.bf16.msra.mxu0 0
        %1048 = vmatprep.subr.bf16.mxu0 0
        %1049 = vmatpush1.bf16.msra.mxu0 0
        %1050 = vmatprep.subr.bf16.mxu0 0
        %1051 = vmatpush1.bf16.msra.mxu0 0
        %1052 = vmatprep.subr.bf16.mxu0 0
        %1053 = vmatpush1.bf16.msra.mxu0 0
        %1054 = vmatprep.mubr.bf16.mxu0 0
        %1055 = vmatmul.mubr.bf16.gmra.mrb[0].mxu0 %v1014
        %v1056 = vpop.f32.mrb[0].mxu0
        %v1057 = vadd.f32 0.0, %v1056
        %v1058 = vpop.f32.mrb[0].mxu0
        %v1059 = vpop.f32.mrb[0].mxu0
        %v1060 = vadd.f32 0.0, %v1059
        %v1061 = vpop.f32.mrb[0].mxu0
        %1062 = vmatprep.mubr.bf16.mxu0 0
        %1063 = vmatmul.mubr.bf16.gmra.mrb[0].mxu0 %v1017
        %v1064 = vpop.f32.mrb[0].mxu0
        %v1065 = vadd.f32 0.0, %v1064
        %v1066 = vpop.f32.mrb[0].mxu0
        %v1067 = vpop.f32.mrb[0].mxu0
        %v1068 = vadd.f32 0.0, %v1067
        %v1069 = vpop.f32.mrb[0].mxu0
        %1070 = vdwg.mxu0
        %v1071 = vadd.f32 %v998, %v1057
        %v1072 = vadd.f32 %v999, %v1060
        %v1073 = vadd.f32 %v1000, %v1065
        %v1074 = vadd.f32 %v1001, %v1068
        %v1075 = vld [vmem:[%s4] sm:$0x1]
        %v1077 = vlaneseq
        %v1078 = vshrl.u32 %v1077, 7
        %v1079 = vsub.s32 0, %v1078
        %v1080 = vrot.slane %v1075, %v1079
        %v1082 = vadd.f32 %v1071, %v1080
        %v1083 = vadd.f32 %v1072, %v1080
        %v1084 = vadd.f32 %v1073, %v1080
        %v1085 = vadd.f32 %v1074, %v1080
        %v1086 = vmax.f32 %v1082, 0.0
        %v1087 = vmax.f32 %v1083, 0.0
        %v1088 = vmax.f32 %v1084, 0.0
        %v1089 = vmax.f32 %v1085, 0.0
        %v1090 = vpack.c.bf16 %v1087, %v1086
        %v1091 = vpack.c.bf16 %v1089, %v1088
        %v1094 = vunpack.c.l.b16 %v1090
        %v1095 = vunpack.c.h.b16 %v1090
        %v1096 = vunpack.c.l.b16 %v1091
        %v1097 = vunpack.c.h.b16 %v1091
        %v1098 = vpack.c.b16 %v1094, %v1094
        %v1099 = vpack.c.b16 %v1095, %v1095
        %v1100 = vpack.c.b16 %v1096, %v1096
        %v1101 = vpack.c.b16 %v1097, %v1097
        %vm1106 = vcmask 519168
        %1107 = vst.msk [vmem:[%s301] sm:$0xf] %vm1106, %v1098
        %1108 = vst.msk [vmem:[%s301 + $0x4] sm:$0xf] %vm1106, %v1099
        %1109 = vst.msk [vmem:[%s301 + $0x8] sm:$0xf] %vm1106, %v1100
        %1110 = vst.msk [vmem:[%s301 + $0xc] sm:$0xf] %vm1106, %v1101
        %s1111 = sand.u32 %s171, 1
        %s1112 = scalar_lea.sflag [#allocation3], %s1111
        %s1113 = sand.u32 %s171, 1
        %s1114 = smul.addr %s1113, 16
        %s1115 = scalar_lea.vmem [#allocation2], %s1114
        // Predicated region
        $region41: #{tpu_custom_call.1} parent=39 // pred_check
          %p1116 = pneg %p181
        $region42: #{tpu_custom_call.1} parent=39 // pred_check_branch
          %1118 = sbr.rel (%p1116) target = $region44
        $region43: #{tpu_custom_call.1} parent=39 // pred_region
          %s1120 = ssub.s32 256, 256
          %1121 = vsyncadd %s1112, %s1120
          %s1122 = smul.addr %s24, 4
          %s1123 = smul.addr %s23, 128
          %s1124 = sadd.s32 %s1122, %s1123
          %s1125 = smul.addr %s1124, 64
          %s1126 = scalar_lea.hbm %s5, %s1125
          %s1127 = sshll.u32 %s1115, 4
          %s1128 = int_to_ptr.vmem [resolvable:$true] %s1127
          %1133 = dma.vmem_to_hbm [thread:$0]  %s1128, 256, %s1126, %s1112, 64, 64, 4
        $region44: #{tpu_custom_call.1} parent=39 // pred_fallthru
          _
      $region40: #{tpu_custom_call.1} parent=5 // pred_fallthru
        _
      %p1134 = scmp.le.s32.totalorder 2, %s14
      // Predicated region
      $region45: #{tpu_custom_call.1} parent=5 // pred_check
        %p1135 = pneg %p1134
      $region46: #{tpu_custom_call.1} parent=5 // pred_check_branch
        %1137 = sbr.rel (%p1135) target = $region48
      $region47: #{tpu_custom_call.1} parent=5 // pred_region
        %s1138 = ssub.s32 %s14, 2
        // Predicated region
        $region49: #{tpu_custom_call.1} parent=47 // pred_check
          %p1139 = pneg %p187
        $region50: #{tpu_custom_call.1} parent=47 // pred_check_branch
          %1141 = sbr.rel (%p1139) target = $region52
        $region51: #{tpu_custom_call.1} parent=47 // pred_region
          %s1142 = sand.u32 %s172, 1
          %s1143 = scalar_lea.sflag [#allocation3], %s1142
          %s1144 = sand.u32 %s172, 1
          %s1145 = smul.addr %s1144, 16
          %s1146 = scalar_lea.vmem [#allocation2], %s1145
          %1147 = dma.done %s1143, 256
        $region52: #{tpu_custom_call.1} parent=47 // pred_fallthru
          _
      $region48: #{tpu_custom_call.1} parent=5 // pred_fallthru
        _
    $region6: #{tpu_custom_call.1} parent=1 // loop_footer
      %s18 = sadd.s32 1, %s14
    $region7: #{tpu_custom_call.1} parent=1 // loop_footer_branch
      %13 = sbr.rel target = $region3
    $region8: #{tpu_custom_call.1} parent=1 // loop_exit
      _
    %1148 = vsyncpa [#allocation3], 1
    %s1149 = scalar_lea.sflag [#allocation3], 1
    %1150 = vsyncpa %s1149, 1

</llo_original>
